<compile_context>
chip_gen: v7x
topology: tpu7x:2x2x1
jax: 0.10.0
libtpu: 0.0.40
codegen_flags: <defaults>
</compile_context>

<pallas_src>
import functools

import jax
import jax.numpy as jnp
from jax.experimental import pallas as pl
from jax.experimental.pallas import tpu as pltpu  # noqa: F401  (TPU backend assumed)


# ----------------------------------------------------------------------------
# Fused kernel (single invocation, everything VMEM-resident):
#   per-view edge head + RL gate + IntraGNN aggregation + inter-view attention
#   fusion.  Outputs: edge predictions and fused per-region features.
# ----------------------------------------------------------------------------
def _fused_kernel(V, B, R, slope, thresholds,
                  x_ref,      # (V, B*R, F)  f32  gathered, view-major features
                  a_ref,      # (V, B, R, R) f32  gathered, view-major adjacency
                  wf_ref,     # (V, F, NC)   edge-head weights
                  bf_ref,     # (V, 1, NC)   edge-head bias
                  w1_ref,     # (V, F, H)    IntraGNN projection
                  wa_ref,     # (H, A)       inter-view attention weight
                  ba_ref,     # (1, A)       inter-view attention bias
                  qT_ref,     # (A, 1)       attention query (pre-transposed)
                  ep_ref,     # (V, B*R, NC) out: edge predictions
                  bfeat_ref,  # (B*R, H)     out: fused features
                  ):
    hs = []
    logits = []

    for v in range(V):                                  # static unroll (V small)
        x = x_ref[v]                                    # (B*R, F) f32

        # ---- edge prediction head: tanh(Linear_v(x)), stacked over batch ----
        ep = jnp.tanh(
            jnp.dot(x, wf_ref[v], preferred_element_type=jnp.float32)
            + bf_ref[v])                                # (B*R, NC)
        ep_ref[v] = ep

        # ---- RL-threshold region gate (f32 elementwise) ----------------------
        gate = jnp.mean(jnp.abs(ep), axis=-1, keepdims=True)     # (B*R, 1)
        keep = (gate >= thresholds[v]).astype(jnp.float32)       # (B*R, 1)

        # ---- IntraGNN: gated adjacency aggregation + Linear + LeakyReLU ------
        # (A * keep_cols) @ X == A @ (keep_rows * X): mask rows of X, avoiding
        # any cross-lane relayout of the keep vector.
        xg = (x * keep).reshape(B, R, x.shape[-1])               # (B, R, F)
        m = jnp.einsum('brc,bcf->brf', a_ref[v], xg,
                       preferred_element_type=jnp.float32)       # (B, R, F)
        m = m.reshape(B * R, m.shape[-1])                        # (B*R, F)
        h = jnp.dot(m, w1_ref[v], preferred_element_type=jnp.float32)  # (B*R, H)
        h = jnp.where(h > 0, h, slope * h)                       # LeakyReLU
        hs.append(h)

        # ---- per-view attention logit: mean_b,r  q . tanh(W h + b) -----------
        t = jnp.tanh(
            jnp.dot(h, wa_ref[...], preferred_element_type=jnp.float32)
            + ba_ref[...])                                       # (B*R, A)
        s = jnp.dot(t, qT_ref[...], preferred_element_type=jnp.float32)  # (B*R, 1)
        logits.append(jnp.mean(s, keepdims=True))                # (1, 1)

    # ---- softmax over views + weighted fusion --------------------------------
    mx = logits[0]
    for v in range(1, V):
        mx = jnp.maximum(mx, logits[v])
    exps = [jnp.exp(l - mx) for l in logits]
    denom = exps[0]
    for v in range(1, V):
        denom = denom + exps[v]
    inv = pl.reciprocal(denom, approx=True)                      # EUP slot

    fused = (exps[0] * inv) * hs[0]
    for v in range(1, V):
        fused = fused + (exps[v] * inv) * hs[v]                  # (B*R, H)

    bfeat_ref[...] = fused


def fused_rtgnn_forward_pass(batch_idx, features, weights, params):
    N, V, R, F = features.shape
    H = params['hidden_dim']
    NC = params['node_classes']
    B = int(batch_idx.shape[0])
    slope = float(params['slope'])
    thresholds = tuple(float(t) for t in params['thresholds'])

    # Batch gather + view-major layout in the wrapper (tiny payload, one-shot).
    xg = jnp.transpose(features[batch_idx], (1, 0, 2, 3)).reshape(V, B * R, F)
    ag = jnp.transpose(weights[batch_idx], (1, 0, 2, 3))          # (V, B, R, R)
    qT = params['attn_q'].T                                       # (A, 1)

    kernel = functools.partial(_fused_kernel, V, B, R, slope, thresholds)

    # Gridless pallas_call: every operand / output is a whole-array VMEM block
    # (total resident data << 1 MiB on every TPU generation).
    ep_flat, bfeat_flat = pl.pallas_call(
        kernel,
        out_shape=(
            jax.ShapeDtypeStruct((V, B * R, NC), jnp.float32),    # edge predicts
            jax.ShapeDtypeStruct((B * R, H), jnp.float32),        # fused features
        ),
    )(xg, ag,
      params['fnn_w'], params['fnn_b'], params['intra_w'],
      params['attn_w'], params['attn_b'], qT)

    return ep_flat, bfeat_flat


# ----------------------------------------------------------------------------
# Forward wrapper (mirrors OneLayerRTGNN.forward, inference path)
# ----------------------------------------------------------------------------
def one_layer_rtgnn_forward(params, features, weights, inputs):
    (batch_idx, batch_labels, regions_labels, train_flag,
     _epoch, _iter, _num_batchs) = inputs

    _, V, R, _ = features.shape
    B = int(batch_idx.shape[0])
    H = params['hidden_dim']
    NC = params['node_classes']

    ep_flat, bfeat_flat = fused_rtgnn_forward_pass(
        batch_idx, features, weights, params)

    # Row-major metadata-only reshapes (no relayout inside the kernel).
    edge_predicts = ep_flat.reshape(V, B, R, NC)
    batch_features = bfeat_flat.reshape(B, R * H)

    # mat2vec == 'concat' + output_fnn_concat: lane-dense (B, R*H) @ (R*H, IC)
    # projection done wrapper-side (M=B rows can't occupy the MXU anyway).
    gnn_predicts = (batch_features @ params['out_w_concat']
                    + params['out_b_concat'])

    # per-view RL score = fraction of regions kept (cheap wrapper-side reduce
    # of the edge-prediction output; same f32 math as the in-kernel gate).
    thr = jnp.asarray(params['thresholds'], jnp.float32)
    gate = jnp.mean(jnp.abs(edge_predicts), axis=-1)              # (V, B, R)
    keep = (gate >= thr[:, None, None]).astype(jnp.float32)
    view_scores = jnp.mean(keep, axis=(1, 2))                     # (V,)

    # TODO(synk): host-side RL_module threshold update / RL logging is stateful
    # Python in the reference and is not reproduced here.
    return (batch_features, batch_labels, regions_labels, gnn_predicts,
            edge_predicts, train_flag, view_scores)


# ----------------------------------------------------------------------------
# Deterministic parameter / input construction
# ----------------------------------------------------------------------------
def _xavier(key, shape):
    fan_in, fan_out = shape[-2], shape[-1]
    lim = (6.0 / (fan_in + fan_out)) ** 0.5
    return jax.random.uniform(key, shape, jnp.float32, -lim, lim)


def build_params(key, num_views, num_regions, feat_dim, hidden_dim,
                 node_classes, instance_classes, attn_vec_dim, slope,
                 threshold_start):
    ks = jax.random.split(key, 6)
    return {
        'fnn_w': _xavier(ks[0], (num_views, feat_dim, node_classes)),
        'fnn_b': jnp.zeros((num_views, 1, node_classes), jnp.float32),
        'intra_w': _xavier(ks[1], (num_views, feat_dim, hidden_dim)),
        'attn_w': _xavier(ks[2], (hidden_dim, attn_vec_dim)),
        'attn_b': jnp.zeros((1, attn_vec_dim), jnp.float32),
        'attn_q': _xavier(ks[3], (1, attn_vec_dim)),
        'out_w_concat': _xavier(ks[4], (hidden_dim * num_regions,
                                        instance_classes)),
        'out_b_concat': jnp.zeros((1, instance_classes), jnp.float32),
        # RL thresholds are a host-side Python list in the reference module;
        # kept as static compile-time constants here (threshold change =>
        # recompile).
        'thresholds': tuple([threshold_start] * num_views),
        'slope': slope,
        'hidden_dim': hidden_dim,
        'node_classes': node_classes,
        'instance_classes': instance_classes,
    }


if __name__ == "__main__":
    # small, module-consistent shapes
    N, V, R = 8, 2, 16           # instances, num_views, num_regions
    F = R                        # feature dim == num_regions (corr-matrix rows)
    H, NC, IC, A = 32, 4, 3, 8   # hidden_dim, node_classes, instance_classes, attn_vec_dim
    B = 4                        # batch size
    slope, dropout, threshold_start = 0.2, 0.0, 0.1

    key = jax.random.PRNGKey(0)
    k_feat, k_wt, k_par, k_lab, k_reg = jax.random.split(key, 5)

    features = jax.random.normal(k_feat, (N, V, R, F), jnp.float32)
    weights = jax.random.uniform(k_wt, (N, V, R, R), jnp.float32)

    params = build_params(k_par, V, R, F, H, NC, IC, A, slope, threshold_start)

    batch_idx = jnp.array([0, 2, 4, 6], jnp.int32)
    batch_labels = jax.random.randint(k_lab, (B,), 0, IC)
    regions_labels = jax.random.randint(k_reg, (R,), 0, NC)

    inputs = (batch_idx, batch_labels, regions_labels, False, 0, 0, 1)

    out = one_layer_rtgnn_forward(params, features, weights, inputs)
    (batch_features, _, _, gnn_predicts, edge_predicts, _, view_scores) = out
    jax.block_until_ready((batch_features, gnn_predicts, edge_predicts,
                           view_scores))

    assert batch_features.shape == (B, R * H)
    assert gnn_predicts.shape == (B, IC)
    assert edge_predicts.shape == (V, B, R, NC)
    assert view_scores.shape == (V,)
    print("KERNEL_OK")
</pallas_src>

<mosaic_0001>
module attributes {stable_mosaic.version = 11 : i64} {
  func.func @_fused_kernel(%arg0: memref<2x64x16xf32, #tpu.memory_space<vmem>>, %arg1: memref<2x4x16x16xf32, #tpu.memory_space<vmem>>, %arg2: memref<2x16x4xf32, #tpu.memory_space<vmem>>, %arg3: memref<2x1x4xf32, #tpu.memory_space<vmem>>, %arg4: memref<2x16x32xf32, #tpu.memory_space<vmem>>, %arg5: memref<32x8xf32, #tpu.memory_space<vmem>>, %arg6: memref<1x8xf32, #tpu.memory_space<vmem>>, %arg7: memref<8x1xf32, #tpu.memory_space<vmem>>, %arg8: memref<2x64x4xf32, #tpu.memory_space<vmem>>, %arg9: memref<64x32xf32, #tpu.memory_space<vmem>>) attributes {dimension_semantics = [], scalar_prefetch = 0 : i64, scratch_operands = 0 : i64, tpu.core_type = #tpu.core_type<tc>} {
    %c0 = arith.constant 0 : index
    %c0_0 = arith.constant 0 : index
    %c0_1 = arith.constant 0 : index
    %0 = vector.load %arg0[%c0, %c0_0, %c0_1] : memref<2x64x16xf32, #tpu.memory_space<vmem>>, vector<1x64x16xf32>
    %1 = vector.shape_cast %0 : vector<1x64x16xf32> to vector<64x16xf32>
    %c0_2 = arith.constant 0 : index
    %c0_3 = arith.constant 0 : index
    %c0_4 = arith.constant 0 : index
    %2 = vector.load %arg2[%c0_2, %c0_3, %c0_4] : memref<2x16x4xf32, #tpu.memory_space<vmem>>, vector<1x16x4xf32>
    %3 = vector.shape_cast %2 : vector<1x16x4xf32> to vector<16x4xf32>
    %cst = arith.constant dense<0.000000e+00> : vector<64x4xf32>
    %4 = tpu.matmul %1, %3, %cst {dimension_numbers = #tpu.dot_dimension_numbers<[1], [0], [0], [1], [0, 0, 1, 1], [], []>} : vector<64x16xf32>, vector<16x4xf32>, vector<64x4xf32> -> vector<64x4xf32>
    %c0_5 = arith.constant 0 : index
    %c0_6 = arith.constant 0 : index
    %c0_7 = arith.constant 0 : index
    %5 = vector.load %arg3[%c0_5, %c0_6, %c0_7] : memref<2x1x4xf32, #tpu.memory_space<vmem>>, vector<1x1x4xf32>
    %6 = vector.shape_cast %5 : vector<1x1x4xf32> to vector<1x4xf32>
    %7 = vector.broadcast %6 : vector<1x4xf32> to vector<64x4xf32>
    %8 = arith.addf %4, %7 : vector<64x4xf32>
    %9 = math.tanh %8 : vector<64x4xf32>
    %c0_8 = arith.constant 0 : index
    %c0_9 = arith.constant 0 : index
    %c0_10 = arith.constant 0 : index
    %10 = vector.load %arg8[%c0_8, %c0_9, %c0_10] : memref<2x64x4xf32, #tpu.memory_space<vmem>>, vector<1x64x4xf32>
    %11 = vector.shape_cast %10 : vector<1x64x4xf32> to vector<64x4xf32>
    %12 = vector.shape_cast %9 : vector<64x4xf32> to vector<1x64x4xf32>
    tpu.vector_store %arg8[%c0_8, %c0_9, %c0_10], %12 {strides = array<i32>} : memref<2x64x4xf32, #tpu.memory_space<vmem>>, vector<1x64x4xf32>,
    %13 = math.absf %9 : vector<64x4xf32>
    %cst_11 = arith.constant dense<0.000000e+00> : vector<64xf32>
    %14 = vector.multi_reduction <add>, %13, %cst_11 [1] : vector<64x4xf32> to vector<64xf32>
    %15 = vector.shape_cast %14 : vector<64xf32> to vector<64x1xf32>
    %cst_12 = arith.constant 4.000000e+00 : f32
    %16 = vector.broadcast %cst_12 : f32 to vector<64x1xf32>
    %17 = arith.divf %15, %16 : vector<64x1xf32>
    %cst_13 = arith.constant 1.000000e-01 : f32
    %18 = vector.broadcast %cst_13 : f32 to vector<64x1xf32>
    %19 = arith.cmpf oge, %17, %18 : vector<64x1xf32>
    %20 = arith.extui %19 : vector<64x1xi1> to vector<64x1xi32>
    %21 = arith.sitofp %20 : vector<64x1xi32> to vector<64x1xf32>
    %22 = vector.broadcast %21 : vector<64x1xf32> to vector<64x16xf32>
    %23 = arith.mulf %1, %22 : vector<64x16xf32>
    %24 = vector.shape_cast %23 : vector<64x16xf32> to vector<4x16x16xf32>
    %c0_14 = arith.constant 0 : index
    %c0_15 = arith.constant 0 : index
    %c0_16 = arith.constant 0 : index
    %c0_17 = arith.constant 0 : index
    %25 = vector.load %arg1[%c0_14, %c0_15, %c0_16, %c0_17] : memref<2x4x16x16xf32, #tpu.memory_space<vmem>>, vector<1x4x16x16xf32>
    %26 = vector.shape_cast %25 : vector<1x4x16x16xf32> to vector<4x16x16xf32>
    "tpu.trace_start"() <{level = 10 : i32, message = "brc,bcf->brf"}> : () -> ()
    %cst_18 = arith.constant dense<0.000000e+00> : vector<4x16x16xf32>
    %27 = tpu.matmul %26, %24, %cst_18 {dimension_numbers = #tpu.dot_dimension_numbers<[2], [1], [1], [2], [0, 0, 0, 1, 1, 2], [0], [0]>} : vector<4x16x16xf32>, vector<4x16x16xf32>, vector<4x16x16xf32> -> vector<4x16x16xf32>
    "tpu.trace_stop"() : () -> ()
    %28 = vector.shape_cast %27 : vector<4x16x16xf32> to vector<64x16xf32>
    %c0_19 = arith.constant 0 : index
    %c0_20 = arith.constant 0 : index
    %c0_21 = arith.constant 0 : index
    %29 = vector.load %arg4[%c0_19, %c0_20, %c0_21] : memref<2x16x32xf32, #tpu.memory_space<vmem>>, vector<1x16x32xf32>
    %30 = vector.shape_cast %29 : vector<1x16x32xf32> to vector<16x32xf32>
    %cst_22 = arith.constant dense<0.000000e+00> : vector<64x32xf32>
    %31 = tpu.matmul %28, %30, %cst_22 {dimension_numbers = #tpu.dot_dimension_numbers<[1], [0], [0], [1], [0, 0, 1, 1], [], []>} : vector<64x16xf32>, vector<16x32xf32>, vector<64x32xf32> -> vector<64x32xf32>
    %cst_23 = arith.constant 0.000000e+00 : f32
    %32 = vector.broadcast %cst_23 : f32 to vector<64x32xf32>
    %33 = arith.cmpf ogt, %31, %32 : vector<64x32xf32>
    %cst_24 = arith.constant 2.000000e-01 : f32
    %34 = vector.broadcast %cst_24 : f32 to vector<64x32xf32>
    %35 = arith.mulf %34, %31 : vector<64x32xf32>
    %36 = arith.select %33, %31, %35 : vector<64x32xi1>, vector<64x32xf32>
    %c0_25 = arith.constant 0 : index
    %c0_26 = arith.constant 0 : index
    %37 = vector.load %arg5[%c0_25, %c0_26] : memref<32x8xf32, #tpu.memory_space<vmem>>, vector<32x8xf32>
    %cst_27 = arith.constant dense<0.000000e+00> : vector<64x8xf32>
    %38 = tpu.matmul %36, %37, %cst_27 {dimension_numbers = #tpu.dot_dimension_numbers<[1], [0], [0], [1], [0, 0, 1, 1], [], []>} : vector<64x32xf32>, vector<32x8xf32>, vector<64x8xf32> -> vector<64x8xf32>
    %c0_28 = arith.constant 0 : index
    %c0_29 = arith.constant 0 : index
    %39 = vector.load %arg6[%c0_28, %c0_29] : memref<1x8xf32, #tpu.memory_space<vmem>>, vector<1x8xf32>
    %40 = vector.broadcast %39 : vector<1x8xf32> to vector<64x8xf32>
    %41 = arith.addf %38, %40 : vector<64x8xf32>
    %42 = math.tanh %41 : vector<64x8xf32>
    %c0_30 = arith.constant 0 : index
    %c0_31 = arith.constant 0 : index
    %43 = vector.load %arg7[%c0_30, %c0_31] : memref<8x1xf32, #tpu.memory_space<vmem>>, vector<8x1xf32>
    %cst_32 = arith.constant dense<0.000000e+00> : vector<64x1xf32>
    %44 = tpu.matmul %42, %43, %cst_32 {dimension_numbers = #tpu.dot_dimension_numbers<[1], [0], [0], [1], [0, 0, 1, 1], [], []>} : vector<64x8xf32>, vector<8x1xf32>, vector<64x1xf32> -> vector<64x1xf32>
    %45 = vector.shape_cast %44 : vector<64x1xf32> to vector<1x64x1xf32>
    %cst_33 = arith.constant dense<0.000000e+00> : vector<1xf32>
    %46 = vector.multi_reduction <add>, %45, %cst_33 [1, 2] : vector<1x64x1xf32> to vector<1xf32>
    %47 = vector.shape_cast %46 : vector<1xf32> to vector<1x1x1xf32>
    %48 = vector.extract %47[0, 0, 0] : f32 from vector<1x1x1xf32>
    %49 = vector.broadcast %48 : f32 to vector<1x1xf32>
    %cst_34 = arith.constant 6.400000e+01 : f32
    %50 = vector.broadcast %cst_34 : f32 to vector<1x1xf32>
    %51 = arith.divf %49, %50 : vector<1x1xf32>
    %c1 = arith.constant 1 : index
    %c0_35 = arith.constant 0 : index
    %c0_36 = arith.constant 0 : index
    %52 = vector.load %arg0[%c1, %c0_35, %c0_36] : memref<2x64x16xf32, #tpu.memory_space<vmem>>, vector<1x64x16xf32>
    %53 = vector.shape_cast %52 : vector<1x64x16xf32> to vector<64x16xf32>
    %c1_37 = arith.constant 1 : index
    %c0_38 = arith.constant 0 : index
    %c0_39 = arith.constant 0 : index
    %54 = vector.load %arg2[%c1_37, %c0_38, %c0_39] : memref<2x16x4xf32, #tpu.memory_space<vmem>>, vector<1x16x4xf32>
    %55 = vector.shape_cast %54 : vector<1x16x4xf32> to vector<16x4xf32>
    %cst_40 = arith.constant dense<0.000000e+00> : vector<64x4xf32>
    %56 = tpu.matmul %53, %55, %cst_40 {dimension_numbers = #tpu.dot_dimension_numbers<[1], [0], [0], [1], [0, 0, 1, 1], [], []>} : vector<64x16xf32>, vector<16x4xf32>, vector<64x4xf32> -> vector<64x4xf32>
    %c1_41 = arith.constant 1 : index
    %c0_42 = arith.constant 0 : index
    %c0_43 = arith.constant 0 : index
    %57 = vector.load %arg3[%c1_41, %c0_42, %c0_43] : memref<2x1x4xf32, #tpu.memory_space<vmem>>, vector<1x1x4xf32>
    %58 = vector.shape_cast %57 : vector<1x1x4xf32> to vector<1x4xf32>
    %59 = vector.broadcast %58 : vector<1x4xf32> to vector<64x4xf32>
    %60 = arith.addf %56, %59 : vector<64x4xf32>
    %61 = math.tanh %60 : vector<64x4xf32>
    %c1_44 = arith.constant 1 : index
    %c0_45 = arith.constant 0 : index
    %c0_46 = arith.constant 0 : index
    %62 = vector.load %arg8[%c1_44, %c0_45, %c0_46] : memref<2x64x4xf32, #tpu.memory_space<vmem>>, vector<1x64x4xf32>
    %63 = vector.shape_cast %62 : vector<1x64x4xf32> to vector<64x4xf32>
    %64 = vector.shape_cast %61 : vector<64x4xf32> to vector<1x64x4xf32>
    tpu.vector_store %arg8[%c1_44, %c0_45, %c0_46], %64 {strides = array<i32>} : memref<2x64x4xf32, #tpu.memory_space<vmem>>, vector<1x64x4xf32>,
    %65 = math.absf %61 : vector<64x4xf32>
    %cst_47 = arith.constant dense<0.000000e+00> : vector<64xf32>
    %66 = vector.multi_reduction <add>, %65, %cst_47 [1] : vector<64x4xf32> to vector<64xf32>
    %67 = vector.shape_cast %66 : vector<64xf32> to vector<64x1xf32>
    %cst_48 = arith.constant 4.000000e+00 : f32
    %68 = vector.broadcast %cst_48 : f32 to vector<64x1xf32>
    %69 = arith.divf %67, %68 : vector<64x1xf32>
    %cst_49 = arith.constant 1.000000e-01 : f32
    %70 = vector.broadcast %cst_49 : f32 to vector<64x1xf32>
    %71 = arith.cmpf oge, %69, %70 : vector<64x1xf32>
    %72 = arith.extui %71 : vector<64x1xi1> to vector<64x1xi32>
    %73 = arith.sitofp %72 : vector<64x1xi32> to vector<64x1xf32>
    %74 = vector.broadcast %73 : vector<64x1xf32> to vector<64x16xf32>
    %75 = arith.mulf %53, %74 : vector<64x16xf32>
    %76 = vector.shape_cast %75 : vector<64x16xf32> to vector<4x16x16xf32>
    %c1_50 = arith.constant 1 : index
    %c0_51 = arith.constant 0 : index
    %c0_52 = arith.constant 0 : index
    %c0_53 = arith.constant 0 : index
    %77 = vector.load %arg1[%c1_50, %c0_51, %c0_52, %c0_53] : memref<2x4x16x16xf32, #tpu.memory_space<vmem>>, vector<1x4x16x16xf32>
    %78 = vector.shape_cast %77 : vector<1x4x16x16xf32> to vector<4x16x16xf32>
    "tpu.trace_start"() <{level = 10 : i32, message = "brc,bcf->brf"}> : () -> ()
    %cst_54 = arith.constant dense<0.000000e+00> : vector<4x16x16xf32>
    %79 = tpu.matmul %78, %76, %cst_54 {dimension_numbers = #tpu.dot_dimension_numbers<[2], [1], [1], [2], [0, 0, 0, 1, 1, 2], [0], [0]>} : vector<4x16x16xf32>, vector<4x16x16xf32>, vector<4x16x16xf32> -> vector<4x16x16xf32>
    "tpu.trace_stop"() : () -> ()
    %80 = vector.shape_cast %79 : vector<4x16x16xf32> to vector<64x16xf32>
    %c1_55 = arith.constant 1 : index
    %c0_56 = arith.constant 0 : index
    %c0_57 = arith.constant 0 : index
    %81 = vector.load %arg4[%c1_55, %c0_56, %c0_57] : memref<2x16x32xf32, #tpu.memory_space<vmem>>, vector<1x16x32xf32>
    %82 = vector.shape_cast %81 : vector<1x16x32xf32> to vector<16x32xf32>
    %cst_58 = arith.constant dense<0.000000e+00> : vector<64x32xf32>
    %83 = tpu.matmul %80, %82, %cst_58 {dimension_numbers = #tpu.dot_dimension_numbers<[1], [0], [0], [1], [0, 0, 1, 1], [], []>} : vector<64x16xf32>, vector<16x32xf32>, vector<64x32xf32> -> vector<64x32xf32>
    %cst_59 = arith.constant 0.000000e+00 : f32
    %84 = vector.broadcast %cst_59 : f32 to vector<64x32xf32>
    %85 = arith.cmpf ogt, %83, %84 : vector<64x32xf32>
    %cst_60 = arith.constant 2.000000e-01 : f32
    %86 = vector.broadcast %cst_60 : f32 to vector<64x32xf32>
    %87 = arith.mulf %86, %83 : vector<64x32xf32>
    %88 = arith.select %85, %83, %87 : vector<64x32xi1>, vector<64x32xf32>
    %c0_61 = arith.constant 0 : index
    %c0_62 = arith.constant 0 : index
    %89 = vector.load %arg5[%c0_61, %c0_62] : memref<32x8xf32, #tpu.memory_space<vmem>>, vector<32x8xf32>
    %cst_63 = arith.constant dense<0.000000e+00> : vector<64x8xf32>
    %90 = tpu.matmul %88, %89, %cst_63 {dimension_numbers = #tpu.dot_dimension_numbers<[1], [0], [0], [1], [0, 0, 1, 1], [], []>} : vector<64x32xf32>, vector<32x8xf32>, vector<64x8xf32> -> vector<64x8xf32>
    %c0_64 = arith.constant 0 : index
    %c0_65 = arith.constant 0 : index
    %91 = vector.load %arg6[%c0_64, %c0_65] : memref<1x8xf32, #tpu.memory_space<vmem>>, vector<1x8xf32>
    %92 = vector.broadcast %91 : vector<1x8xf32> to vector<64x8xf32>
    %93 = arith.addf %90, %92 : vector<64x8xf32>
    %94 = math.tanh %93 : vector<64x8xf32>
    %c0_66 = arith.constant 0 : index
    %c0_67 = arith.constant 0 : index
    %95 = vector.load %arg7[%c0_66, %c0_67] : memref<8x1xf32, #tpu.memory_space<vmem>>, vector<8x1xf32>
    %cst_68 = arith.constant dense<0.000000e+00> : vector<64x1xf32>
    %96 = tpu.matmul %94, %95, %cst_68 {dimension_numbers = #tpu.dot_dimension_numbers<[1], [0], [0], [1], [0, 0, 1, 1], [], []>} : vector<64x8xf32>, vector<8x1xf32>, vector<64x1xf32> -> vector<64x1xf32>
    %97 = vector.shape_cast %96 : vector<64x1xf32> to vector<1x64x1xf32>
    %cst_69 = arith.constant dense<0.000000e+00> : vector<1xf32>
    %98 = vector.multi_reduction <add>, %97, %cst_69 [1, 2] : vector<1x64x1xf32> to vector<1xf32>
    %99 = vector.shape_cast %98 : vector<1xf32> to vector<1x1x1xf32>
    %100 = vector.extract %99[0, 0, 0] : f32 from vector<1x1x1xf32>
    %101 = vector.broadcast %100 : f32 to vector<1x1xf32>
    %cst_70 = arith.constant 6.400000e+01 : f32
    %102 = vector.broadcast %cst_70 : f32 to vector<1x1xf32>
    %103 = arith.divf %101, %102 : vector<1x1xf32>
    %104 = arith.maximumf %51, %103 : vector<1x1xf32>
    %105 = arith.subf %51, %104 : vector<1x1xf32>
    %106 = math.exp %105 : vector<1x1xf32>
    %107 = arith.subf %103, %104 : vector<1x1xf32>
    %108 = math.exp %107 : vector<1x1xf32>
    %109 = arith.addf %106, %108 : vector<1x1xf32>
    %110 = tpu.reciprocal %109 {approx = true} : vector<1x1xf32> -> vector<1x1xf32>
    %111 = arith.mulf %106, %110 : vector<1x1xf32>
    %112 = vector.broadcast %111 : vector<1x1xf32> to vector<64x32xf32>
    %113 = arith.mulf %112, %36 : vector<64x32xf32>
    %114 = arith.mulf %108, %110 : vector<1x1xf32>
    %115 = vector.broadcast %114 : vector<1x1xf32> to vector<64x32xf32>
    %116 = arith.mulf %115, %88 : vector<64x32xf32>
    %117 = arith.addf %113, %116 : vector<64x32xf32>
    %c0_71 = arith.constant 0 : index
    %c0_72 = arith.constant 0 : index
    %118 = vector.load %arg9[%c0_71, %c0_72] : memref<64x32xf32, #tpu.memory_space<vmem>>, vector<64x32xf32>
    tpu.vector_store %arg9[%c0_71, %c0_72], %117 {strides = array<i32>} : memref<64x32xf32, #tpu.memory_space<vmem>>, vector<64x32xf32>,
    return
  }
}

</mosaic_0001>

<llo_original>
// kernel: tpu_custom_call.1
$region0: #{tpu_custom_call.1}
  #allocation0 [shape = 'u32[]', space=smem, size = 0x4, offset = 0x4, fixed_abs, tag = 'smem constant byte address 0x4 - core index']
  #allocation1 [shape = 'u32[144,128]{1,0:T(1,128)}', space=vmem, size = 0x12000, scoped, tag = 'internal scratch']
  %s0 = inlined_call_operand.vmem [shape: f32[2,64,16], index: 0, kind: input, shape index: {}]
  %s1 = inlined_call_operand.vmem [shape: f32[2,4,16,16], index: 1, kind: input, shape index: {}]
  %s2 = inlined_call_operand.vmem [shape: f32[2,16,4], index: 2, kind: input, shape index: {}]
  %s3 = inlined_call_operand.vmem [shape: f32[2,1,4], index: 3, kind: input, shape index: {}]
  %s4 = inlined_call_operand.vmem [shape: f32[2,16,32], index: 4, kind: input, shape index: {}]
  %s5 = inlined_call_operand.vmem [shape: f32[32,8], index: 5, kind: input, shape index: {}]
  %s6 = inlined_call_operand.vmem [shape: f32[1,8], index: 6, kind: input, shape index: {}]
  %s7 = inlined_call_operand.vmem [shape: f32[8,1], index: 7, kind: input, shape index: {}]
  %s8 = inlined_call_operand.vmem [shape: f32[2,64,4], index: 8, kind: output, shape index: {0}]
  %s9 = inlined_call_operand.vmem [shape: f32[64,32], index: 9, kind: output, shape index: {1}]
  %10 = xla_tuple %s8, %s9
  %s11 = sld [smem:[#allocation0]]
  $region50: #{tpu_custom_call.1} parent=0
    _
  %s13 = ssub.s32 1, %s11
  %s14 = scalar_select 0, %s13, %s11
  // Predicated region
  $region2: #{tpu_custom_call.1} parent=0 // pred_check
    _
  $region3: #{tpu_custom_call.1} parent=0 // pred_check_branch
    %16 = sbr.rel (0) target = $region5
  $region4: #{tpu_custom_call.1} parent=0 // pred_region
    _
  $region5: #{tpu_custom_call.1} parent=0 // pred_fallthru
    _
  // Predicated region
  $region6: #{tpu_custom_call.1} parent=0 // pred_check
    _
  $region7: #{tpu_custom_call.1} parent=0 // pred_check_branch
    %18 = sbr.rel (0) target = $region9
  $region8: #{tpu_custom_call.1} parent=0 // pred_region
    _
  $region9: #{tpu_custom_call.1} parent=0 // pred_fallthru
    _
  // Predicated region
  $region10: #{tpu_custom_call.1} parent=0 // pred_check
    _
  $region11: #{tpu_custom_call.1} parent=0 // pred_check_branch
    %20 = sbr.rel (0) target = $region13
  $region12: #{tpu_custom_call.1} parent=0 // pred_region
    _
  $region13: #{tpu_custom_call.1} parent=0 // pred_fallthru
    _
  // Predicated region
  $region14: #{tpu_custom_call.1} parent=0 // pred_check
    _
  $region15: #{tpu_custom_call.1} parent=0 // pred_check_branch
    %22 = sbr.rel (0) target = $region17
  $region16: #{tpu_custom_call.1} parent=0 // pred_region
    _
  $region17: #{tpu_custom_call.1} parent=0 // pred_fallthru
    _
  // Predicated region
  $region18: #{tpu_custom_call.1} parent=0 // pred_check
    _
  $region19: #{tpu_custom_call.1} parent=0 // pred_check_branch
    %24 = sbr.rel (0) target = $region21
  $region20: #{tpu_custom_call.1} parent=0 // pred_region
    _
  $region21: #{tpu_custom_call.1} parent=0 // pred_fallthru
    _
  // Predicated region
  $region22: #{tpu_custom_call.1} parent=0 // pred_check
    _
  $region23: #{tpu_custom_call.1} parent=0 // pred_check_branch
    %26 = sbr.rel (0) target = $region25
  $region24: #{tpu_custom_call.1} parent=0 // pred_region
    _
  $region25: #{tpu_custom_call.1} parent=0 // pred_fallthru
    _
  // Predicated region
  $region26: #{tpu_custom_call.1} parent=0 // pred_check
    _
  $region27: #{tpu_custom_call.1} parent=0 // pred_check_branch
    %28 = sbr.rel (0) target = $region29
  $region28: #{tpu_custom_call.1} parent=0 // pred_region
    _
  $region29: #{tpu_custom_call.1} parent=0 // pred_fallthru
    _
  // Predicated region
  $region30: #{tpu_custom_call.1} parent=0 // pred_check
    _
  $region31: #{tpu_custom_call.1} parent=0 // pred_check_branch
    %30 = sbr.rel (0) target = $region33
  $region32: #{tpu_custom_call.1} parent=0 // pred_region
    _
  $region33: #{tpu_custom_call.1} parent=0 // pred_fallthru
    _
  %v31 = vld [vmem:[%s0] sm:$0xff]
  %v32 = vld [vmem:[%s0 + $0x8] sm:$0xff]
  %v33 = vld [vmem:[%s0 + $0x10] sm:$0xff]
  %v34 = vld [vmem:[%s0 + $0x18] sm:$0xff]
  %v35 = vld [vmem:[%s0 + $0x20] sm:$0xff]
  %v36 = vld [vmem:[%s0 + $0x28] sm:$0xff]
  %v37 = vld [vmem:[%s0 + $0x30] sm:$0xff]
  %v38 = vld [vmem:[%s0 + $0x38] sm:$0xff]
  %v39 = vld [vmem:[%s2] sm:$0xff]
  %v40 = vld [vmem:[%s2 + $0x8] sm:$0xff]
  %v41 = vld [vmem:[%s3] sm:$0x1]
  %v43 = vlaneseq
  %v44 = vshrl.u32 %v43, 7
  %v45 = vsub.s32 0, %v44
  %v46 = vrot.slane %v41, %v45
  %vm48 = vcmask 130048
  %v50 = vsel %vm48, %v31, 0
  %v53 = vsel %vm48, %v32, 0
  %v56 = vsel %vm48, %v33, 0
  %v59 = vsel %vm48, %v34, 0
  %v62 = vsel %vm48, %v35, 0
  %v65 = vsel %vm48, %v36, 0
  %v68 = vsel %vm48, %v37, 0
  %v71 = vsel %vm48, %v38, 0
  %73 = vmatprep.subr.mxu0 0.0
  %74 = vmatpush1.msra.mxu0 %v39
  %75 = vmatprep.subr.mxu0 0.0
  %76 = vmatpush1.msra.mxu0 %v40
  %77 = vmatprep.subr.mxu0 0.0
  %78 = vmatpush1.msra.mxu0 0.0
  %79 = vmatprep.subr.mxu0 0.0
  %80 = vmatpush1.msra.mxu0 0.0
  %81 = vmatprep.subr.mxu0 0.0
  %82 = vmatpush1.msra.mxu0 0.0
  %83 = vmatprep.subr.mxu0 0.0
  %84 = vmatpush1.msra.mxu0 0.0
  %85 = vmatprep.subr.mxu0 0.0
  %86 = vmatpush1.msra.mxu0 0.0
  %87 = vmatprep.subr.mxu0 0.0
  %88 = vmatpush1.msra.mxu0 0.0
  %89 = vmatprep.subr.mxu0 0.0
  %90 = vmatpush1.msra.mxu0 0.0
  %91 = vmatprep.subr.mxu0 0.0
  %92 = vmatpush1.msra.mxu0 0.0
  %93 = vmatprep.subr.mxu0 0.0
  %94 = vmatpush1.msra.mxu0 0.0
  %95 = vmatprep.subr.mxu0 0.0
  %96 = vmatpush1.msra.mxu0 0.0
  %97 = vmatprep.subr.mxu0 0.0
  %98 = vmatpush1.msra.mxu0 0.0
  %99 = vmatprep.subr.mxu0 0.0
  %100 = vmatpush1.msra.mxu0 0.0
  %101 = vmatprep.subr.mxu0 0.0
  %102 = vmatpush1.msra.mxu0 0.0
  %103 = vmatprep.subr.mxu0 0.0
  %104 = vmatpush1.msra.mxu0 0.0
  %105 = vmatprep.subr.mxu0 0.0
  %106 = vmatpush1.msra.mxu0 0.0
  %107 = vmatprep.subr.mxu0 0.0
  %108 = vmatpush1.msra.mxu0 0.0
  %109 = vmatprep.subr.mxu0 0.0
  %110 = vmatpush1.msra.mxu0 0.0
  %111 = vmatprep.subr.mxu0 0.0
  %112 = vmatpush1.msra.mxu0 0.0
  %113 = vmatprep.subr.mxu0 0.0
  %114 = vmatpush1.msra.mxu0 0.0
  %115 = vmatprep.subr.mxu0 0.0
  %116 = vmatpush1.msra.mxu0 0.0
  %117 = vmatprep.subr.mxu0 0.0
  %118 = vmatpush1.msra.mxu0 0.0
  %119 = vmatprep.subr.mxu0 0.0
  %120 = vmatpush1.msra.mxu0 0.0
  %121 = vmatprep.subr.mxu0 0.0
  %122 = vmatpush1.msra.mxu0 0.0
  %123 = vmatprep.subr.mxu0 0.0
  %124 = vmatpush1.msra.mxu0 0.0
  %125 = vmatprep.subr.mxu0 0.0
  %126 = vmatpush1.msra.mxu0 0.0
  %127 = vmatprep.subr.mxu0 0.0
  %128 = vmatpush1.msra.mxu0 0.0
  %129 = vmatprep.subr.mxu0 0.0
  %130 = vmatpush1.msra.mxu0 0.0
  %131 = vmatprep.subr.mxu0 0.0
  %132 = vmatpush1.msra.mxu0 0.0
  %133 = vmatprep.subr.mxu0 0.0
  %134 = vmatpush1.msra.mxu0 0.0
  %135 = vmatprep.subr.mxu0 0.0
  %136 = vmatpush1.msra.mxu0 0.0
  %137 = vmatprep.mubr.f32.mxu0 0.0
  %138 = vmatmul.mubr.f32.gmra.mrb[0].mxu0 %v50
  %v139 = vpop.f32.mrb[0].mxu0
  %v140 = vadd.f32 %v46, %v139
  %v141 = vpop.f32.mrb[0].mxu0
  %142 = vmatprep.mubr.f32.mxu0 0.0
  %143 = vmatmul.mubr.f32.gmra.mrb[0].mxu0 %v53
  %v144 = vpop.f32.mrb[0].mxu0
  %v145 = vadd.f32 %v46, %v144
  %v146 = vpop.f32.mrb[0].mxu0
  %147 = vmatprep.mubr.f32.mxu0 0.0
  %148 = vmatmul.mubr.f32.gmra.mrb[0].mxu0 %v56
  %v149 = vpop.f32.mrb[0].mxu0
  %v150 = vadd.f32 %v46, %v149
  %v151 = vpop.f32.mrb[0].mxu0
  %152 = vmatprep.mubr.f32.mxu0 0.0
  %153 = vmatmul.mubr.f32.gmra.mrb[0].mxu0 %v59
  %v154 = vpop.f32.mrb[0].mxu0
  %v155 = vadd.f32 %v46, %v154
  %v156 = vpop.f32.mrb[0].mxu0
  %157 = vmatprep.mubr.f32.mxu0 0.0
  %158 = vmatmul.mubr.f32.gmra.mrb[0].mxu0 %v62
  %v159 = vpop.f32.mrb[0].mxu0
  %v160 = vadd.f32 %v46, %v159
  %v161 = vpop.f32.mrb[0].mxu0
  %162 = vmatprep.mubr.f32.mxu0 0.0
  %163 = vmatmul.mubr.f32.gmra.mrb[0].mxu0 %v65
  %v164 = vpop.f32.mrb[0].mxu0
  %v165 = vadd.f32 %v46, %v164
  %v166 = vpop.f32.mrb[0].mxu0
  %167 = vmatprep.mubr.f32.mxu0 0.0
  %168 = vmatmul.mubr.f32.gmra.mrb[0].mxu0 %v68
  %v169 = vpop.f32.mrb[0].mxu0
  %v170 = vadd.f32 %v46, %v169
  %v171 = vpop.f32.mrb[0].mxu0
  %172 = vmatprep.mubr.f32.mxu0 0.0
  %173 = vmatmul.mubr.f32.gmra.mrb[0].mxu0 %v71
  %v174 = vpop.f32.mrb[0].mxu0
  %v175 = vadd.f32 %v46, %v174
  %v176 = vpop.f32.mrb[0].mxu0
  %177 = vdwg.mxu0
  %v178 = vtanh.pop %v140
  %v179 = vtanh.pop %v145
  %v180 = vtanh.pop %v150
  %v181 = vtanh.pop %v155
  %v182 = vtanh.pop %v160
  %v183 = vtanh.pop %v165
  %v184 = vtanh.pop %v170
  %v185 = vtanh.pop %v175
  %vm186 = vcmask 31744
  %187 = vst.msk [vmem:[%s8] sm:$0xff] %vm186, %v178
  %188 = vst.msk [vmem:[%s8 + $0x8] sm:$0xff] %vm186, %v179
  %189 = vst.msk [vmem:[%s8 + $0x10] sm:$0xff] %vm186, %v180
  %190 = vst.msk [vmem:[%s8 + $0x18] sm:$0xff] %vm186, %v181
  %191 = vst.msk [vmem:[%s8 + $0x20] sm:$0xff] %vm186, %v182
  %192 = vst.msk [vmem:[%s8 + $0x28] sm:$0xff] %vm186, %v183
  %193 = vst.msk [vmem:[%s8 + $0x30] sm:$0xff] %vm186, %v184
  %194 = vst.msk [vmem:[%s8 + $0x38] sm:$0xff] %vm186, %v185
  %v195 = vand.u32 2147483647, %v178
  %v196 = vand.u32 2147483647, %v179
  %v197 = vand.u32 2147483647, %v180
  %v198 = vand.u32 2147483647, %v181
  %v199 = vand.u32 2147483647, %v182
  %v200 = vand.u32 2147483647, %v183
  %v201 = vand.u32 2147483647, %v184
  %v202 = vand.u32 2147483647, %v185
  %v203 = vsel %vm186, %v195, 0.0
  %204 = vadd.xlane.f32.xlu0 %v203
  %v205 = vpop.xlane.xlu0 %204
  %v206 = vsel %vm186, %v196, 0.0
  %207 = vadd.xlane.f32.xlu0 %v206
  %v208 = vpop.xlane.xlu0 %207
  %v209 = vsel %vm186, %v197, 0.0
  %210 = vadd.xlane.f32.xlu0 %v209
  %v211 = vpop.xlane.xlu0 %210
  %v212 = vsel %vm186, %v198, 0.0
  %213 = vadd.xlane.f32.xlu0 %v212
  %v214 = vpop.xlane.xlu0 %213
  %v215 = vsel %vm186, %v199, 0.0
  %216 = vadd.xlane.f32.xlu0 %v215
  %v217 = vpop.xlane.xlu0 %216
  %v218 = vsel %vm186, %v200, 0.0
  %219 = vadd.xlane.f32.xlu0 %v218
  %v220 = vpop.xlane.xlu0 %219
  %v221 = vsel %vm186, %v201, 0.0
  %222 = vadd.xlane.f32.xlu0 %v221
  %v223 = vpop.xlane.xlu0 %222
  %v224 = vsel %vm186, %v202, 0.0
  %225 = vadd.xlane.f32.xlu0 %v224
  %v226 = vpop.xlane.xlu0 %225
  %v227 = vrcp.pop 4.0
  %v228 = vmul.f32 %v205, %v227
  %v229 = vmul.f32 %v208, %v227
  %v230 = vmul.f32 %v211, %v227
  %v231 = vmul.f32 %v214, %v227
  %v232 = vmul.f32 %v217, %v227
  %v233 = vmul.f32 %v220, %v227
  %v234 = vmul.f32 %v223, %v227
  %v235 = vmul.f32 %v226, %v227
  %vm236 = vcmp.ge.f32.partialorder %v228, 0.1
  %vm237 = vcmp.ge.f32.partialorder %v229, 0.1
  %vm238 = vcmp.ge.f32.partialorder %v230, 0.1
  %vm239 = vcmp.ge.f32.partialorder %v231, 0.1
  %vm240 = vcmp.ge.f32.partialorder %v232, 0.1
  %vm241 = vcmp.ge.f32.partialorder %v233, 0.1
  %vm242 = vcmp.ge.f32.partialorder %v234, 0.1
  %vm243 = vcmp.ge.f32.partialorder %v235, 0.1
  %v244 = vsel %vm236, 1, 0
  %v245 = vsel %vm237, 1, 0
  %v246 = vsel %vm238, 1, 0
  %v247 = vsel %vm239, 1, 0
  %v248 = vsel %vm240, 1, 0
  %v249 = vsel %vm241, 1, 0
  %v250 = vsel %vm242, 1, 0
  %v251 = vsel %vm243, 1, 0
  %v252 = vcvt.s32.f32 %v244
  %v253 = vcvt.s32.f32 %v245
  %v254 = vcvt.s32.f32 %v246
  %v255 = vcvt.s32.f32 %v247
  %v256 = vcvt.s32.f32 %v248
  %v257 = vcvt.s32.f32 %v249
  %v258 = vcvt.s32.f32 %v250
  %v259 = vcvt.s32.f32 %v251
  %v260 = vmul.f32 %v31, %v252
  %v261 = vmul.f32 %v32, %v253
  %v262 = vmul.f32 %v33, %v254
  %v263 = vmul.f32 %v34, %v255
  %v264 = vmul.f32 %v35, %v256
  %v265 = vmul.f32 %v36, %v257
  %v266 = vmul.f32 %v37, %v258
  %v267 = vmul.f32 %v38, %v259
  %v268 = vld [vmem:[%s1] sm:$0xff]
  %v269 = vld [vmem:[%s1 + $0x8] sm:$0xff]
  %v270 = vld [vmem:[%s1 + $0x10] sm:$0xff]
  %v271 = vld [vmem:[%s1 + $0x18] sm:$0xff]
  %v272 = vld [vmem:[%s1 + $0x20] sm:$0xff]
  %v273 = vld [vmem:[%s1 + $0x28] sm:$0xff]
  %v274 = vld [vmem:[%s1 + $0x30] sm:$0xff]
  %v275 = vld [vmem:[%s1 + $0x38] sm:$0xff]
  %v277 = vsel %vm48, %v268, 0
  %v280 = vsel %vm48, %v269, 0
  %282 = vmatprep.subr.mxu0 0.0
  %283 = vmatpush1.msra.mxu0 %v260
  %284 = vmatprep.subr.mxu0 0.0
  %285 = vmatpush1.msra.mxu0 %v261
  %286 = vmatprep.subr.mxu0 0.0
  %287 = vmatpush1.msra.mxu0 0.0
  %288 = vmatprep.subr.mxu0 0.0
  %289 = vmatpush1.msra.mxu0 0.0
  %290 = vmatprep.subr.mxu0 0.0
  %291 = vmatpush1.msra.mxu0 0.0
  %292 = vmatprep.subr.mxu0 0.0
  %293 = vmatpush1.msra.mxu0 0.0
  %294 = vmatprep.subr.mxu0 0.0
  %295 = vmatpush1.msra.mxu0 0.0
  %296 = vmatprep.subr.mxu0 0.0
  %297 = vmatpush1.msra.mxu0 0.0
  %298 = vmatprep.subr.mxu0 0.0
  %299 = vmatpush1.msra.mxu0 0.0
  %300 = vmatprep.subr.mxu0 0.0
  %301 = vmatpush1.msra.mxu0 0.0
  %302 = vmatprep.subr.mxu0 0.0
  %303 = vmatpush1.msra.mxu0 0.0
  %304 = vmatprep.subr.mxu0 0.0
  %305 = vmatpush1.msra.mxu0 0.0
  %306 = vmatprep.subr.mxu0 0.0
  %307 = vmatpush1.msra.mxu0 0.0
  %308 = vmatprep.subr.mxu0 0.0
  %309 = vmatpush1.msra.mxu0 0.0
  %310 = vmatprep.subr.mxu0 0.0
  %311 = vmatpush1.msra.mxu0 0.0
  %312 = vmatprep.subr.mxu0 0.0
  %313 = vmatpush1.msra.mxu0 0.0
  %314 = vmatprep.subr.mxu0 0.0
  %315 = vmatpush1.msra.mxu0 0.0
  %316 = vmatprep.subr.mxu0 0.0
  %317 = vmatpush1.msra.mxu0 0.0
  %318 = vmatprep.subr.mxu0 0.0
  %319 = vmatpush1.msra.mxu0 0.0
  %320 = vmatprep.subr.mxu0 0.0
  %321 = vmatpush1.msra.mxu0 0.0
  %322 = vmatprep.subr.mxu0 0.0
  %323 = vmatpush1.msra.mxu0 0.0
  %324 = vmatprep.subr.mxu0 0.0
  %325 = vmatpush1.msra.mxu0 0.0
  %326 = vmatprep.subr.mxu0 0.0
  %327 = vmatpush1.msra.mxu0 0.0
  %328 = vmatprep.subr.mxu0 0.0
  %329 = vmatpush1.msra.mxu0 0.0
  %330 = vmatprep.subr.mxu0 0.0
  %331 = vmatpush1.msra.mxu0 0.0
  %332 = vmatprep.subr.mxu0 0.0
  %333 = vmatpush1.msra.mxu0 0.0
  %334 = vmatprep.subr.mxu0 0.0
  %335 = vmatpush1.msra.mxu0 0.0
  %336 = vmatprep.subr.mxu0 0.0
  %337 = vmatpush1.msra.mxu0 0.0
  %338 = vmatprep.subr.mxu0 0.0
  %339 = vmatpush1.msra.mxu0 0.0
  %340 = vmatprep.subr.mxu0 0.0
  %341 = vmatpush1.msra.mxu0 0.0
  %342 = vmatprep.subr.mxu0 0.0
  %343 = vmatpush1.msra.mxu0 0.0
  %344 = vmatprep.subr.mxu0 0.0
  %345 = vmatpush1.msra.mxu0 0.0
  %346 = vmatprep.mubr.f32.mxu0 0.0
  %347 = vmatmul.mubr.f32.gmra.mrb[0].mxu0 %v277
  %v348 = vpop.f32.mrb[0].mxu0
  %v349 = vadd.f32 0.0, %v348
  %v350 = vpop.f32.mrb[0].mxu0
  %351 = vmatprep.mubr.f32.mxu0 0.0
  %352 = vmatmul.mubr.f32.gmra.mrb[0].mxu0 %v280
  %v353 = vpop.f32.mrb[0].mxu0
  %v354 = vadd.f32 0.0, %v353
  %v355 = vpop.f32.mrb[0].mxu0
  %356 = vdwg.mxu0
  %v358 = vsel %vm48, %v270, 0
  %v361 = vsel %vm48, %v271, 0
  %363 = vmatprep.subr.mxu0 0.0
  %364 = vmatpush1.msra.mxu0 %v262
  %365 = vmatprep.subr.mxu0 0.0
  %366 = vmatpush1.msra.mxu0 %v263
  %367 = vmatprep.subr.mxu0 0.0
  %368 = vmatpush1.msra.mxu0 0.0
  %369 = vmatprep.subr.mxu0 0.0
  %370 = vmatpush1.msra.mxu0 0.0
  %371 = vmatprep.subr.mxu0 0.0
  %372 = vmatpush1.msra.mxu0 0.0
  %373 = vmatprep.subr.mxu0 0.0
  %374 = vmatpush1.msra.mxu0 0.0
  %375 = vmatprep.subr.mxu0 0.0
  %376 = vmatpush1.msra.mxu0 0.0
  %377 = vmatprep.subr.mxu0 0.0
  %378 = vmatpush1.msra.mxu0 0.0
  %379 = vmatprep.subr.mxu0 0.0
  %380 = vmatpush1.msra.mxu0 0.0
  %381 = vmatprep.subr.mxu0 0.0
  %382 = vmatpush1.msra.mxu0 0.0
  %383 = vmatprep.subr.mxu0 0.0
  %384 = vmatpush1.msra.mxu0 0.0
  %385 = vmatprep.subr.mxu0 0.0
  %386 = vmatpush1.msra.mxu0 0.0
  %387 = vmatprep.subr.mxu0 0.0
  %388 = vmatpush1.msra.mxu0 0.0
  %389 = vmatprep.subr.mxu0 0.0
  %390 = vmatpush1.msra.mxu0 0.0
  %391 = vmatprep.subr.mxu0 0.0
  %392 = vmatpush1.msra.mxu0 0.0
  %393 = vmatprep.subr.mxu0 0.0
  %394 = vmatpush1.msra.mxu0 0.0
  %395 = vmatprep.subr.mxu0 0.0
  %396 = vmatpush1.msra.mxu0 0.0
  %397 = vmatprep.subr.mxu0 0.0
  %398 = vmatpush1.msra.mxu0 0.0
  %399 = vmatprep.subr.mxu0 0.0
  %400 = vmatpush1.msra.mxu0 0.0
  %401 = vmatprep.subr.mxu0 0.0
  %402 = vmatpush1.msra.mxu0 0.0
  %403 = vmatprep.subr.mxu0 0.0
  %404 = vmatpush1.msra.mxu0 0.0
  %405 = vmatprep.subr.mxu0 0.0
  %406 = vmatpush1.msra.mxu0 0.0
  %407 = vmatprep.subr.mxu0 0.0
  %408 = vmatpush1.msra.mxu0 0.0
  %409 = vmatprep.subr.mxu0 0.0
  %410 = vmatpush1.msra.mxu0 0.0
  %411 = vmatprep.subr.mxu0 0.0
  %412 = vmatpush1.msra.mxu0 0.0
  %413 = vmatprep.subr.mxu0 0.0
  %414 = vmatpush1.msra.mxu0 0.0
  %415 = vmatprep.subr.mxu0 0.0
  %416 = vmatpush1.msra.mxu0 0.0
  %417 = vmatprep.subr.mxu0 0.0
  %418 = vmatpush1.msra.mxu0 0.0
  %419 = vmatprep.subr.mxu0 0.0
  %420 = vmatpush1.msra.mxu0 0.0
  %421 = vmatprep.subr.mxu0 0.0
  %422 = vmatpush1.msra.mxu0 0.0
  %423 = vmatprep.subr.mxu0 0.0
  %424 = vmatpush1.msra.mxu0 0.0
  %425 = vmatprep.subr.mxu0 0.0
  %426 = vmatpush1.msra.mxu0 0.0
  %427 = vmatprep.mubr.f32.mxu0 0.0
  %428 = vmatmul.mubr.f32.gmra.mrb[0].mxu0 %v358
  %v429 = vpop.f32.mrb[0].mxu0
  %v430 = vadd.f32 0.0, %v429
  %v431 = vpop.f32.mrb[0].mxu0
  %432 = vmatprep.mubr.f32.mxu0 0.0
  %433 = vmatmul.mubr.f32.gmra.mrb[0].mxu0 %v361
  %v434 = vpop.f32.mrb[0].mxu0
  %v435 = vadd.f32 0.0, %v434
  %v436 = vpop.f32.mrb[0].mxu0
  %437 = vdwg.mxu0
  %v439 = vsel %vm48, %v272, 0
  %v442 = vsel %vm48, %v273, 0
  %444 = vmatprep.subr.mxu0 0.0
  %445 = vmatpush1.msra.mxu0 %v264
  %446 = vmatprep.subr.mxu0 0.0
  %447 = vmatpush1.msra.mxu0 %v265
  %448 = vmatprep.subr.mxu0 0.0
  %449 = vmatpush1.msra.mxu0 0.0
  %450 = vmatprep.subr.mxu0 0.0
  %451 = vmatpush1.msra.mxu0 0.0
  %452 = vmatprep.subr.mxu0 0.0
  %453 = vmatpush1.msra.mxu0 0.0
  %454 = vmatprep.subr.mxu0 0.0
  %455 = vmatpush1.msra.mxu0 0.0
  %456 = vmatprep.subr.mxu0 0.0
  %457 = vmatpush1.msra.mxu0 0.0
  %458 = vmatprep.subr.mxu0 0.0
  %459 = vmatpush1.msra.mxu0 0.0
  %460 = vmatprep.subr.mxu0 0.0
  %461 = vmatpush1.msra.mxu0 0.0
  %462 = vmatprep.subr.mxu0 0.0
  %463 = vmatpush1.msra.mxu0 0.0
  %464 = vmatprep.subr.mxu0 0.0
  %465 = vmatpush1.msra.mxu0 0.0
  %466 = vmatprep.subr.mxu0 0.0
  %467 = vmatpush1.msra.mxu0 0.0
  %468 = vmatprep.subr.mxu0 0.0
  %469 = vmatpush1.msra.mxu0 0.0
  %470 = vmatprep.subr.mxu0 0.0
  %471 = vmatpush1.msra.mxu0 0.0
  %472 = vmatprep.subr.mxu0 0.0
  %473 = vmatpush1.msra.mxu0 0.0
  %474 = vmatprep.subr.mxu0 0.0
  %475 = vmatpush1.msra.mxu0 0.0
  %476 = vmatprep.subr.mxu0 0.0
  %477 = vmatpush1.msra.mxu0 0.0
  %478 = vmatprep.subr.mxu0 0.0
  %479 = vmatpush1.msra.mxu0 0.0
  %480 = vmatprep.subr.mxu0 0.0
  %481 = vmatpush1.msra.mxu0 0.0
  %482 = vmatprep.subr.mxu0 0.0
  %483 = vmatpush1.msra.mxu0 0.0
  %484 = vmatprep.subr.mxu0 0.0
  %485 = vmatpush1.msra.mxu0 0.0
  %486 = vmatprep.subr.mxu0 0.0
  %487 = vmatpush1.msra.mxu0 0.0
  %488 = vmatprep.subr.mxu0 0.0
  %489 = vmatpush1.msra.mxu0 0.0
  %490 = vmatprep.subr.mxu0 0.0
  %491 = vmatpush1.msra.mxu0 0.0
  %492 = vmatprep.subr.mxu0 0.0
  %493 = vmatpush1.msra.mxu0 0.0
  %494 = vmatprep.subr.mxu0 0.0
  %495 = vmatpush1.msra.mxu0 0.0
  %496 = vmatprep.subr.mxu0 0.0
  %497 = vmatpush1.msra.mxu0 0.0
  %498 = vmatprep.subr.mxu0 0.0
  %499 = vmatpush1.msra.mxu0 0.0
  %500 = vmatprep.subr.mxu0 0.0
  %501 = vmatpush1.msra.mxu0 0.0
  %502 = vmatprep.subr.mxu0 0.0
  %503 = vmatpush1.msra.mxu0 0.0
  %504 = vmatprep.subr.mxu0 0.0
  %505 = vmatpush1.msra.mxu0 0.0
  %506 = vmatprep.subr.mxu0 0.0
  %507 = vmatpush1.msra.mxu0 0.0
  %508 = vmatprep.mubr.f32.mxu0 0.0
  %509 = vmatmul.mubr.f32.gmra.mrb[0].mxu0 %v439
  %v510 = vpop.f32.mrb[0].mxu0
  %v511 = vadd.f32 0.0, %v510
  %v512 = vpop.f32.mrb[0].mxu0
  %513 = vmatprep.mubr.f32.mxu0 0.0
  %514 = vmatmul.mubr.f32.gmra.mrb[0].mxu0 %v442
  %v515 = vpop.f32.mrb[0].mxu0
  %v516 = vadd.f32 0.0, %v515
  %v517 = vpop.f32.mrb[0].mxu0
  %518 = vdwg.mxu0
  %v520 = vsel %vm48, %v274, 0
  %v523 = vsel %vm48, %v275, 0
  %525 = vmatprep.subr.mxu0 0.0
  %526 = vmatpush1.msra.mxu0 %v266
  %527 = vmatprep.subr.mxu0 0.0
  %528 = vmatpush1.msra.mxu0 %v267
  %529 = vmatprep.subr.mxu0 0.0
  %530 = vmatpush1.msra.mxu0 0.0
  %531 = vmatprep.subr.mxu0 0.0
  %532 = vmatpush1.msra.mxu0 0.0
  %533 = vmatprep.subr.mxu0 0.0
  %534 = vmatpush1.msra.mxu0 0.0
  %535 = vmatprep.subr.mxu0 0.0
  %536 = vmatpush1.msra.mxu0 0.0
  %537 = vmatprep.subr.mxu0 0.0
  %538 = vmatpush1.msra.mxu0 0.0
  %539 = vmatprep.subr.mxu0 0.0
  %540 = vmatpush1.msra.mxu0 0.0
  %541 = vmatprep.subr.mxu0 0.0
  %542 = vmatpush1.msra.mxu0 0.0
  %543 = vmatprep.subr.mxu0 0.0
  %544 = vmatpush1.msra.mxu0 0.0
  %545 = vmatprep.subr.mxu0 0.0
  %546 = vmatpush1.msra.mxu0 0.0
  %547 = vmatprep.subr.mxu0 0.0
  %548 = vmatpush1.msra.mxu0 0.0
  %549 = vmatprep.subr.mxu0 0.0
  %550 = vmatpush1.msra.mxu0 0.0
  %551 = vmatprep.subr.mxu0 0.0
  %552 = vmatpush1.msra.mxu0 0.0
  %553 = vmatprep.subr.mxu0 0.0
  %554 = vmatpush1.msra.mxu0 0.0
  %555 = vmatprep.subr.mxu0 0.0
  %556 = vmatpush1.msra.mxu0 0.0
  %557 = vmatprep.subr.mxu0 0.0
  %558 = vmatpush1.msra.mxu0 0.0
  %559 = vmatprep.subr.mxu0 0.0
  %560 = vmatpush1.msra.mxu0 0.0
  %561 = vmatprep.subr.mxu0 0.0
  %562 = vmatpush1.msra.mxu0 0.0
  %563 = vmatprep.subr.mxu0 0.0
  %564 = vmatpush1.msra.mxu0 0.0
  %565 = vmatprep.subr.mxu0 0.0
  %566 = vmatpush1.msra.mxu0 0.0
  %567 = vmatprep.subr.mxu0 0.0
  %568 = vmatpush1.msra.mxu0 0.0
  %569 = vmatprep.subr.mxu0 0.0
  %570 = vmatpush1.msra.mxu0 0.0
  %571 = vmatprep.subr.mxu0 0.0
  %572 = vmatpush1.msra.mxu0 0.0
  %573 = vmatprep.subr.mxu0 0.0
  %574 = vmatpush1.msra.mxu0 0.0
  %575 = vmatprep.subr.mxu0 0.0
  %576 = vmatpush1.msra.mxu0 0.0
  %577 = vmatprep.subr.mxu0 0.0
  %578 = vmatpush1.msra.mxu0 0.0
  %579 = vmatprep.subr.mxu0 0.0
  %580 = vmatpush1.msra.mxu0 0.0
  %581 = vmatprep.subr.mxu0 0.0
  %582 = vmatpush1.msra.mxu0 0.0
  %583 = vmatprep.subr.mxu0 0.0
  %584 = vmatpush1.msra.mxu0 0.0
  %585 = vmatprep.subr.mxu0 0.0
  %586 = vmatpush1.msra.mxu0 0.0
  %587 = vmatprep.subr.mxu0 0.0
  %588 = vmatpush1.msra.mxu0 0.0
  %589 = vmatprep.mubr.f32.mxu0 0.0
  %590 = vmatmul.mubr.f32.gmra.mrb[0].mxu0 %v520
  %v591 = vpop.f32.mrb[0].mxu0
  %v592 = vadd.f32 0.0, %v591
  %v593 = vpop.f32.mrb[0].mxu0
  %594 = vmatprep.mubr.f32.mxu0 0.0
  %595 = vmatmul.mubr.f32.gmra.mrb[0].mxu0 %v523
  %v596 = vpop.f32.mrb[0].mxu0
  %v597 = vadd.f32 0.0, %v596
  %v598 = vpop.f32.mrb[0].mxu0
  %599 = vdwg.mxu0
  %v600 = vld [vmem:[%s4] sm:$0xff]
  %v601 = vld [vmem:[%s4 + $0x8] sm:$0xff]
  %v603 = vsel %vm48, %v349, 0
  %v606 = vsel %vm48, %v354, 0
  %v609 = vsel %vm48, %v430, 0
  %v612 = vsel %vm48, %v435, 0
  %v615 = vsel %vm48, %v511, 0
  %v618 = vsel %vm48, %v516, 0
  %v621 = vsel %vm48, %v592, 0
  %v624 = vsel %vm48, %v597, 0
  %626 = vmatprep.subr.mxu0 0.0
  %627 = vmatpush1.msra.mxu0 %v600
  %628 = vmatprep.subr.mxu0 0.0
  %629 = vmatpush1.msra.mxu0 %v601
  %630 = vmatprep.subr.mxu0 0.0
  %631 = vmatpush1.msra.mxu0 0.0
  %632 = vmatprep.subr.mxu0 0.0
  %633 = vmatpush1.msra.mxu0 0.0
  %634 = vmatprep.subr.mxu0 0.0
  %635 = vmatpush1.msra.mxu0 0.0
  %636 = vmatprep.subr.mxu0 0.0
  %637 = vmatpush1.msra.mxu0 0.0
  %638 = vmatprep.subr.mxu0 0.0
  %639 = vmatpush1.msra.mxu0 0.0
  %640 = vmatprep.subr.mxu0 0.0
  %641 = vmatpush1.msra.mxu0 0.0
  %642 = vmatprep.subr.mxu0 0.0
  %643 = vmatpush1.msra.mxu0 0.0
  %644 = vmatprep.subr.mxu0 0.0
  %645 = vmatpush1.msra.mxu0 0.0
  %646 = vmatprep.subr.mxu0 0.0
  %647 = vmatpush1.msra.mxu0 0.0
  %648 = vmatprep.subr.mxu0 0.0
  %649 = vmatpush1.msra.mxu0 0.0
  %650 = vmatprep.subr.mxu0 0.0
  %651 = vmatpush1.msra.mxu0 0.0
  %652 = vmatprep.subr.mxu0 0.0
  %653 = vmatpush1.msra.mxu0 0.0
  %654 = vmatprep.subr.mxu0 0.0
  %655 = vmatpush1.msra.mxu0 0.0
  %656 = vmatprep.subr.mxu0 0.0
  %657 = vmatpush1.msra.mxu0 0.0
  %658 = vmatprep.subr.mxu0 0.0
  %659 = vmatpush1.msra.mxu0 0.0
  %660 = vmatprep.subr.mxu0 0.0
  %661 = vmatpush1.msra.mxu0 0.0
  %662 = vmatprep.subr.mxu0 0.0
  %663 = vmatpush1.msra.mxu0 0.0
  %664 = vmatprep.subr.mxu0 0.0
  %665 = vmatpush1.msra.mxu0 0.0
  %666 = vmatprep.subr.mxu0 0.0
  %667 = vmatpush1.msra.mxu0 0.0
  %668 = vmatprep.subr.mxu0 0.0
  %669 = vmatpush1.msra.mxu0 0.0
  %670 = vmatprep.subr.mxu0 0.0
  %671 = vmatpush1.msra.mxu0 0.0
  %672 = vmatprep.subr.mxu0 0.0
  %673 = vmatpush1.msra.mxu0 0.0
  %674 = vmatprep.subr.mxu0 0.0
  %675 = vmatpush1.msra.mxu0 0.0
  %676 = vmatprep.subr.mxu0 0.0
  %677 = vmatpush1.msra.mxu0 0.0
  %678 = vmatprep.subr.mxu0 0.0
  %679 = vmatpush1.msra.mxu0 0.0
  %680 = vmatprep.subr.mxu0 0.0
  %681 = vmatpush1.msra.mxu0 0.0
  %682 = vmatprep.subr.mxu0 0.0
  %683 = vmatpush1.msra.mxu0 0.0
  %684 = vmatprep.subr.mxu0 0.0
  %685 = vmatpush1.msra.mxu0 0.0
  %686 = vmatprep.subr.mxu0 0.0
  %687 = vmatpush1.msra.mxu0 0.0
  %688 = vmatprep.subr.mxu0 0.0
  %689 = vmatpush1.msra.mxu0 0.0
  %690 = vmatprep.mubr.f32.mxu0 0.0
  %691 = vmatmul.mubr.f32.gmra.mrb[0].mxu0 %v603
  %v692 = vpop.f32.mrb[0].mxu0
  %v693 = vadd.f32 0.0, %v692
  %v694 = vpop.f32.mrb[0].mxu0
  %695 = vmatprep.mubr.f32.mxu0 0.0
  %696 = vmatmul.mubr.f32.gmra.mrb[0].mxu0 %v606
  %v697 = vpop.f32.mrb[0].mxu0
  %v698 = vadd.f32 0.0, %v697
  %v699 = vpop.f32.mrb[0].mxu0
  %700 = vmatprep.mubr.f32.mxu0 0.0
  %701 = vmatmul.mubr.f32.gmra.mrb[0].mxu0 %v609
  %v702 = vpop.f32.mrb[0].mxu0
  %v703 = vadd.f32 0.0, %v702
  %v704 = vpop.f32.mrb[0].mxu0
  %705 = vmatprep.mubr.f32.mxu0 0.0
  %706 = vmatmul.mubr.f32.gmra.mrb[0].mxu0 %v612
  %v707 = vpop.f32.mrb[0].mxu0
  %v708 = vadd.f32 0.0, %v707
  %v709 = vpop.f32.mrb[0].mxu0
  %710 = vmatprep.mubr.f32.mxu0 0.0
  %711 = vmatmul.mubr.f32.gmra.mrb[0].mxu0 %v615
  %v712 = vpop.f32.mrb[0].mxu0
  %v713 = vadd.f32 0.0, %v712
  %v714 = vpop.f32.mrb[0].mxu0
  %715 = vmatprep.mubr.f32.mxu0 0.0
  %716 = vmatmul.mubr.f32.gmra.mrb[0].mxu0 %v618
  %v717 = vpop.f32.mrb[0].mxu0
  %v718 = vadd.f32 0.0, %v717
  %v719 = vpop.f32.mrb[0].mxu0
  %720 = vmatprep.mubr.f32.mxu0 0.0
  %721 = vmatmul.mubr.f32.gmra.mrb[0].mxu0 %v621
  %v722 = vpop.f32.mrb[0].mxu0
  %v723 = vadd.f32 0.0, %v722
  %v724 = vpop.f32.mrb[0].mxu0
  %725 = vmatprep.mubr.f32.mxu0 0.0
  %726 = vmatmul.mubr.f32.gmra.mrb[0].mxu0 %v624
  %v727 = vpop.f32.mrb[0].mxu0
  %v728 = vadd.f32 0.0, %v727
  %v729 = vpop.f32.mrb[0].mxu0
  %730 = vdwg.mxu0
  %vm731 = vcmp.gt.f32.partialorder %v693, 0.0
  %vm732 = vcmp.gt.f32.partialorder %v698, 0.0
  %vm733 = vcmp.gt.f32.partialorder %v703, 0.0
  %vm734 = vcmp.gt.f32.partialorder %v708, 0.0
  %vm735 = vcmp.gt.f32.partialorder %v713, 0.0
  %vm736 = vcmp.gt.f32.partialorder %v718, 0.0
  %vm737 = vcmp.gt.f32.partialorder %v723, 0.0
  %vm738 = vcmp.gt.f32.partialorder %v728, 0.0
  %v739 = vmul.f32 %v693, 0.2
  %v740 = vmul.f32 %v698, 0.2
  %v741 = vmul.f32 %v703, 0.2
  %v742 = vmul.f32 %v708, 0.2
  %v743 = vmul.f32 %v713, 0.2
  %v744 = vmul.f32 %v718, 0.2
  %v745 = vmul.f32 %v723, 0.2
  %v746 = vmul.f32 %v728, 0.2
  %v747 = vsel %vm731, %v693, %v739
  %v748 = vsel %vm732, %v698, %v740
  %v749 = vsel %vm733, %v703, %v741
  %v750 = vsel %vm734, %v708, %v742
  %v751 = vsel %vm735, %v713, %v743
  %v752 = vsel %vm736, %v718, %v744
  %v753 = vsel %vm737, %v723, %v745
  %v754 = vsel %vm738, %v728, %v746
  %v755 = vld [vmem:[%s5] sm:$0xff]
  %v756 = vld [vmem:[%s5 + $0x8] sm:$0xff]
  %v757 = vld [vmem:[%s5 + $0x10] sm:$0xff]
  %v758 = vld [vmem:[%s5 + $0x18] sm:$0xff]
  %v759 = vld [vmem:[%s6] sm:$0x1]
  %v761 = vlaneseq
  %v762 = vshrl.u32 %v761, 7
  %v763 = vsub.s32 0, %v762
  %v764 = vrot.slane %v759, %v763
  %vm766 = vcmask 261120
  %v768 = vsel %vm766, %v747, 0
  %v771 = vsel %vm766, %v748, 0
  %v774 = vsel %vm766, %v749, 0
  %v777 = vsel %vm766, %v750, 0
  %v780 = vsel %vm766, %v751, 0
  %v783 = vsel %vm766, %v752, 0
  %v786 = vsel %vm766, %v753, 0
  %v789 = vsel %vm766, %v754, 0
  %791 = vmatprep.subr.mxu0 0.0
  %792 = vmatpush1.msra.mxu0 %v755
  %793 = vmatprep.subr.mxu0 0.0
  %794 = vmatpush1.msra.mxu0 %v756
  %795 = vmatprep.subr.mxu0 0.0
  %796 = vmatpush1.msra.mxu0 %v757
  %797 = vmatprep.subr.mxu0 0.0
  %798 = vmatpush1.msra.mxu0 %v758
  %799 = vmatprep.subr.mxu0 0.0
  %800 = vmatpush1.msra.mxu0 0.0
  %801 = vmatprep.subr.mxu0 0.0
  %802 = vmatpush1.msra.mxu0 0.0
  %803 = vmatprep.subr.mxu0 0.0
  %804 = vmatpush1.msra.mxu0 0.0
  %805 = vmatprep.subr.mxu0 0.0
  %806 = vmatpush1.msra.mxu0 0.0
  %807 = vmatprep.subr.mxu0 0.0
  %808 = vmatpush1.msra.mxu0 0.0
  %809 = vmatprep.subr.mxu0 0.0
  %810 = vmatpush1.msra.mxu0 0.0
  %811 = vmatprep.subr.mxu0 0.0
  %812 = vmatpush1.msra.mxu0 0.0
  %813 = vmatprep.subr.mxu0 0.0
  %814 = vmatpush1.msra.mxu0 0.0
  %815 = vmatprep.subr.mxu0 0.0
  %816 = vmatpush1.msra.mxu0 0.0
  %817 = vmatprep.subr.mxu0 0.0
  %818 = vmatpush1.msra.mxu0 0.0
  %819 = vmatprep.subr.mxu0 0.0
  %820 = vmatpush1.msra.mxu0 0.0
  %821 = vmatprep.subr.mxu0 0.0
  %822 = vmatpush1.msra.mxu0 0.0
  %823 = vmatprep.subr.mxu0 0.0
  %824 = vmatpush1.msra.mxu0 0.0
  %825 = vmatprep.subr.mxu0 0.0
  %826 = vmatpush1.msra.mxu0 0.0
  %827 = vmatprep.subr.mxu0 0.0
  %828 = vmatpush1.msra.mxu0 0.0
  %829 = vmatprep.subr.mxu0 0.0
  %830 = vmatpush1.msra.mxu0 0.0
  %831 = vmatprep.subr.mxu0 0.0
  %832 = vmatpush1.msra.mxu0 0.0
  %833 = vmatprep.subr.mxu0 0.0
  %834 = vmatpush1.msra.mxu0 0.0
  %835 = vmatprep.subr.mxu0 0.0
  %836 = vmatpush1.msra.mxu0 0.0
  %837 = vmatprep.subr.mxu0 0.0
  %838 = vmatpush1.msra.mxu0 0.0
  %839 = vmatprep.subr.mxu0 0.0
  %840 = vmatpush1.msra.mxu0 0.0
  %841 = vmatprep.subr.mxu0 0.0
  %842 = vmatpush1.msra.mxu0 0.0
  %843 = vmatprep.subr.mxu0 0.0
  %844 = vmatpush1.msra.mxu0 0.0
  %845 = vmatprep.subr.mxu0 0.0
  %846 = vmatpush1.msra.mxu0 0.0
  %847 = vmatprep.subr.mxu0 0.0
  %848 = vmatpush1.msra.mxu0 0.0
  %849 = vmatprep.subr.mxu0 0.0
  %850 = vmatpush1.msra.mxu0 0.0
  %851 = vmatprep.subr.mxu0 0.0
  %852 = vmatpush1.msra.mxu0 0.0
  %853 = vmatprep.subr.mxu0 0.0
  %854 = vmatpush1.msra.mxu0 0.0
  %855 = vmatprep.mubr.f32.mxu0 0.0
  %856 = vmatmul.mubr.f32.gmra.mrb[0].mxu0 %v768
  %v857 = vpop.f32.mrb[0].mxu0
  %v858 = vadd.f32 %v764, %v857
  %v859 = vpop.f32.mrb[0].mxu0
  %860 = vmatprep.mubr.f32.mxu0 0.0
  %861 = vmatmul.mubr.f32.gmra.mrb[0].mxu0 %v771
  %v862 = vpop.f32.mrb[0].mxu0
  %v863 = vadd.f32 %v764, %v862
  %v864 = vpop.f32.mrb[0].mxu0
  %865 = vmatprep.mubr.f32.mxu0 0.0
  %866 = vmatmul.mubr.f32.gmra.mrb[0].mxu0 %v774
  %v867 = vpop.f32.mrb[0].mxu0
  %v868 = vadd.f32 %v764, %v867
  %v869 = vpop.f32.mrb[0].mxu0
  %870 = vmatprep.mubr.f32.mxu0 0.0
  %871 = vmatmul.mubr.f32.gmra.mrb[0].mxu0 %v777
  %v872 = vpop.f32.mrb[0].mxu0
  %v873 = vadd.f32 %v764, %v872
  %v874 = vpop.f32.mrb[0].mxu0
  %875 = vmatprep.mubr.f32.mxu0 0.0
  %876 = vmatmul.mubr.f32.gmra.mrb[0].mxu0 %v780
  %v877 = vpop.f32.mrb[0].mxu0
  %v878 = vadd.f32 %v764, %v877
  %v879 = vpop.f32.mrb[0].mxu0
  %880 = vmatprep.mubr.f32.mxu0 0.0
  %881 = vmatmul.mubr.f32.gmra.mrb[0].mxu0 %v783
  %v882 = vpop.f32.mrb[0].mxu0
  %v883 = vadd.f32 %v764, %v882
  %v884 = vpop.f32.mrb[0].mxu0
  %885 = vmatprep.mubr.f32.mxu0 0.0
  %886 = vmatmul.mubr.f32.gmra.mrb[0].mxu0 %v786
  %v887 = vpop.f32.mrb[0].mxu0
  %v888 = vadd.f32 %v764, %v887
  %v889 = vpop.f32.mrb[0].mxu0
  %890 = vmatprep.mubr.f32.mxu0 0.0
  %891 = vmatmul.mubr.f32.gmra.mrb[0].mxu0 %v789
  %v892 = vpop.f32.mrb[0].mxu0
  %v893 = vadd.f32 %v764, %v892
  %v894 = vpop.f32.mrb[0].mxu0
  %895 = vdwg.mxu0
  %v896 = vtanh.pop %v858
  %v897 = vtanh.pop %v863
  %v898 = vtanh.pop %v868
  %v899 = vtanh.pop %v873
  %v900 = vtanh.pop %v878
  %v901 = vtanh.pop %v883
  %v902 = vtanh.pop %v888
  %v903 = vtanh.pop %v893
  %v904 = vld [vmem:[%s7] sm:$0xff]
  %vm905 = vcmask 64512
  %v907 = vsel %vm905, %v896, 0
  %v910 = vsel %vm905, %v897, 0
  %v913 = vsel %vm905, %v898, 0
  %v916 = vsel %vm905, %v899, 0
  %v919 = vsel %vm905, %v900, 0
  %v922 = vsel %vm905, %v901, 0
  %v925 = vsel %vm905, %v902, 0
  %v928 = vsel %vm905, %v903, 0
  %930 = vmatprep.subr.mxu0 0.0
  %931 = vmatpush1.msra.mxu0 %v904
  %932 = vmatprep.subr.mxu0 0.0
  %933 = vmatpush1.msra.mxu0 0.0
  %934 = vmatprep.subr.mxu0 0.0
  %935 = vmatpush1.msra.mxu0 0.0
  %936 = vmatprep.subr.mxu0 0.0
  %937 = vmatpush1.msra.mxu0 0.0
  %938 = vmatprep.subr.mxu0 0.0
  %939 = vmatpush1.msra.mxu0 0.0
  %940 = vmatprep.subr.mxu0 0.0
  %941 = vmatpush1.msra.mxu0 0.0
  %942 = vmatprep.subr.mxu0 0.0
  %943 = vmatpush1.msra.mxu0 0.0
  %944 = vmatprep.subr.mxu0 0.0
  %945 = vmatpush1.msra.mxu0 0.0
  %946 = vmatprep.subr.mxu0 0.0
  %947 = vmatpush1.msra.mxu0 0.0
  %948 = vmatprep.subr.mxu0 0.0
  %949 = vmatpush1.msra.mxu0 0.0
  %950 = vmatprep.subr.mxu0 0.0
  %951 = vmatpush1.msra.mxu0 0.0
  %952 = vmatprep.subr.mxu0 0.0
  %953 = vmatpush1.msra.mxu0 0.0
  %954 = vmatprep.subr.mxu0 0.0
  %955 = vmatpush1.msra.mxu0 0.0
  %956 = vmatprep.subr.mxu0 0.0
  %957 = vmatpush1.msra.mxu0 0.0
  %958 = vmatprep.subr.mxu0 0.0
  %959 = vmatpush1.msra.mxu0 0.0
  %960 = vmatprep.subr.mxu0 0.0
  %961 = vmatpush1.msra.mxu0 0.0
  %962 = vmatprep.subr.mxu0 0.0
  %963 = vmatpush1.msra.mxu0 0.0
  %964 = vmatprep.subr.mxu0 0.0
  %965 = vmatpush1.msra.mxu0 0.0
  %966 = vmatprep.subr.mxu0 0.0
  %967 = vmatpush1.msra.mxu0 0.0
  %968 = vmatprep.subr.mxu0 0.0
  %969 = vmatpush1.msra.mxu0 0.0
  %970 = vmatprep.subr.mxu0 0.0
  %971 = vmatpush1.msra.mxu0 0.0
  %972 = vmatprep.subr.mxu0 0.0
  %973 = vmatpush1.msra.mxu0 0.0
  %974 = vmatprep.subr.mxu0 0.0
  %975 = vmatpush1.msra.mxu0 0.0
  %976 = vmatprep.subr.mxu0 0.0
  %977 = vmatpush1.msra.mxu0 0.0
  %978 = vmatprep.subr.mxu0 0.0
  %979 = vmatpush1.msra.mxu0 0.0
  %980 = vmatprep.subr.mxu0 0.0
  %981 = vmatpush1.msra.mxu0 0.0
  %982 = vmatprep.subr.mxu0 0.0
  %983 = vmatpush1.msra.mxu0 0.0
  %984 = vmatprep.subr.mxu0 0.0
  %985 = vmatpush1.msra.mxu0 0.0
  %986 = vmatprep.subr.mxu0 0.0
  %987 = vmatpush1.msra.mxu0 0.0
  %988 = vmatprep.subr.mxu0 0.0
  %989 = vmatpush1.msra.mxu0 0.0
  %990 = vmatprep.subr.mxu0 0.0
  %991 = vmatpush1.msra.mxu0 0.0
  %992 = vmatprep.subr.mxu0 0.0
  %993 = vmatpush1.msra.mxu0 0.0
  %994 = vmatprep.mubr.f32.mxu0 0.0
  %995 = vmatmul.mubr.f32.gmra.mrb[0].mxu0 %v907
  %v996 = vpop.f32.mrb[0].mxu0
  %v997 = vadd.f32 0.0, %v996
  %v998 = vpop.f32.mrb[0].mxu0
  %999 = vmatprep.mubr.f32.mxu0 0.0
  %1000 = vmatmul.mubr.f32.gmra.mrb[0].mxu0 %v910
  %v1001 = vpop.f32.mrb[0].mxu0
  %v1002 = vadd.f32 0.0, %v1001
  %v1003 = vpop.f32.mrb[0].mxu0
  %1004 = vmatprep.mubr.f32.mxu0 0.0
  %1005 = vmatmul.mubr.f32.gmra.mrb[0].mxu0 %v913
  %v1006 = vpop.f32.mrb[0].mxu0
  %v1007 = vadd.f32 0.0, %v1006
  %v1008 = vpop.f32.mrb[0].mxu0
  %1009 = vmatprep.mubr.f32.mxu0 0.0
  %1010 = vmatmul.mubr.f32.gmra.mrb[0].mxu0 %v916
  %v1011 = vpop.f32.mrb[0].mxu0
  %v1012 = vadd.f32 0.0, %v1011
  %v1013 = vpop.f32.mrb[0].mxu0
  %1014 = vmatprep.mubr.f32.mxu0 0.0
  %1015 = vmatmul.mubr.f32.gmra.mrb[0].mxu0 %v919
  %v1016 = vpop.f32.mrb[0].mxu0
  %v1017 = vadd.f32 0.0, %v1016
  %v1018 = vpop.f32.mrb[0].mxu0
  %1019 = vmatprep.mubr.f32.mxu0 0.0
  %1020 = vmatmul.mubr.f32.gmra.mrb[0].mxu0 %v922
  %v1021 = vpop.f32.mrb[0].mxu0
  %v1022 = vadd.f32 0.0, %v1021
  %v1023 = vpop.f32.mrb[0].mxu0
  %1024 = vmatprep.mubr.f32.mxu0 0.0
  %1025 = vmatmul.mubr.f32.gmra.mrb[0].mxu0 %v925
  %v1026 = vpop.f32.mrb[0].mxu0
  %v1027 = vadd.f32 0.0, %v1026
  %v1028 = vpop.f32.mrb[0].mxu0
  %1029 = vmatprep.mubr.f32.mxu0 0.0
  %1030 = vmatmul.mubr.f32.gmra.mrb[0].mxu0 %v928
  %v1031 = vpop.f32.mrb[0].mxu0
  %v1032 = vadd.f32 0.0, %v1031
  %v1033 = vpop.f32.mrb[0].mxu0
  %1034 = vdwg.mxu0
  %vm1035 = vcmask 7168
  %v1036 = vsel %vm1035, %v997, 0.0
  %v1037 = vsel %vm1035, %v1002, 0.0
  %v1038 = vadd.f32 %v1036, %v1037
  %v1039 = vsel %vm1035, %v1007, 0.0
  %v1040 = vadd.f32 %v1038, %v1039
  %v1041 = vsel %vm1035, %v1012, 0.0
  %v1042 = vadd.f32 %v1040, %v1041
  %v1043 = vsel %vm1035, %v1017, 0.0
  %v1044 = vadd.f32 %v1042, %v1043
  %v1045 = vsel %vm1035, %v1022, 0.0
  %v1046 = vadd.f32 %v1044, %v1045
  %v1047 = vsel %vm1035, %v1027, 0.0
  %v1048 = vadd.f32 %v1046, %v1047
  %v1049 = vsel %vm1035, %v1032, 0.0
  %v1050 = vadd.f32 %v1048, %v1049
  %1051 = vadd.xlane.f32.xlu0 %v1050
  %v1052 = vpop.xlane.xlu0 %1051
  %v1053 = vrot.slane %v1052, 4
  %v1054 = vadd.f32 %v1052, %v1053
  %v1055 = vrot.slane %v1054, 2
  %v1056 = vadd.f32 %v1054, %v1055
  %v1057 = vrot.slane %v1056, 1
  %v1058 = vadd.f32 %v1056, %v1057
  %s1059 = vtos %v1058
  %v1060 = vstv %s1059
  %v1061 = vrcp.pop 64.0
  %v1062 = vmul.f32 %v1060, %v1061
  %s1063 = scalar_lea.vmem %s0, 64
  %v1064 = vld [vmem:[%s1063] sm:$0xff]
  %v1065 = vld [vmem:[%s1063 + $0x8] sm:$0xff]
  %v1066 = vld [vmem:[%s1063 + $0x10] sm:$0xff]
  %v1067 = vld [vmem:[%s1063 + $0x18] sm:$0xff]
  %v1068 = vld [vmem:[%s1063 + $0x20] sm:$0xff]
  %v1069 = vld [vmem:[%s1063 + $0x28] sm:$0xff]
  %v1070 = vld [vmem:[%s1063 + $0x30] sm:$0xff]
  %v1071 = vld [vmem:[%s1063 + $0x38] sm:$0xff]
  %s1072 = scalar_lea.vmem %s2, 16
  %v1073 = vld [vmem:[%s1072] sm:$0xff]
  %v1074 = vld [vmem:[%s1072 + $0x8] sm:$0xff]
  %s1075 = scalar_lea.vmem %s3, 1
  %v1076 = vld [vmem:[%s1075] sm:$0x1]
  %v1078 = vlaneseq
  %v1079 = vshrl.u32 %v1078, 7
  %v1080 = vsub.s32 0, %v1079
  %v1081 = vrot.slane %v1076, %v1080
  %v1084 = vsel %vm48, %v1064, 0
  %v1087 = vsel %vm48, %v1065, 0
  %v1090 = vsel %vm48, %v1066, 0
  %v1093 = vsel %vm48, %v1067, 0
  %v1096 = vsel %vm48, %v1068, 0
  %v1099 = vsel %vm48, %v1069, 0
  %v1102 = vsel %vm48, %v1070, 0
  %v1105 = vsel %vm48, %v1071, 0
  %1107 = vmatprep.subr.mxu0 0.0
  %1108 = vmatpush1.msra.mxu0 %v1073
  %1109 = vmatprep.subr.mxu0 0.0
  %1110 = vmatpush1.msra.mxu0 %v1074
  %1111 = vmatprep.subr.mxu0 0.0
  %1112 = vmatpush1.msra.mxu0 0.0
  %1113 = vmatprep.subr.mxu0 0.0
  %1114 = vmatpush1.msra.mxu0 0.0
  %1115 = vmatprep.subr.mxu0 0.0
  %1116 = vmatpush1.msra.mxu0 0.0
  %1117 = vmatprep.subr.mxu0 0.0
  %1118 = vmatpush1.msra.mxu0 0.0
  %1119 = vmatprep.subr.mxu0 0.0
  %1120 = vmatpush1.msra.mxu0 0.0
  %1121 = vmatprep.subr.mxu0 0.0
  %1122 = vmatpush1.msra.mxu0 0.0
  %1123 = vmatprep.subr.mxu0 0.0
  %1124 = vmatpush1.msra.mxu0 0.0
  %1125 = vmatprep.subr.mxu0 0.0
  %1126 = vmatpush1.msra.mxu0 0.0
  %1127 = vmatprep.subr.mxu0 0.0
  %1128 = vmatpush1.msra.mxu0 0.0
  %1129 = vmatprep.subr.mxu0 0.0
  %1130 = vmatpush1.msra.mxu0 0.0
  %1131 = vmatprep.subr.mxu0 0.0
  %1132 = vmatpush1.msra.mxu0 0.0
  %1133 = vmatprep.subr.mxu0 0.0
  %1134 = vmatpush1.msra.mxu0 0.0
  %1135 = vmatprep.subr.mxu0 0.0
  %1136 = vmatpush1.msra.mxu0 0.0
  %1137 = vmatprep.subr.mxu0 0.0
  %1138 = vmatpush1.msra.mxu0 0.0
  %1139 = vmatprep.subr.mxu0 0.0
  %1140 = vmatpush1.msra.mxu0 0.0
  %1141 = vmatprep.subr.mxu0 0.0
  %1142 = vmatpush1.msra.mxu0 0.0
  %1143 = vmatprep.subr.mxu0 0.0
  %1144 = vmatpush1.msra.mxu0 0.0
  %1145 = vmatprep.subr.mxu0 0.0
  %1146 = vmatpush1.msra.mxu0 0.0
  %1147 = vmatprep.subr.mxu0 0.0
  %1148 = vmatpush1.msra.mxu0 0.0
  %1149 = vmatprep.subr.mxu0 0.0
  %1150 = vmatpush1.msra.mxu0 0.0
  %1151 = vmatprep.subr.mxu0 0.0
  %1152 = vmatpush1.msra.mxu0 0.0
  %1153 = vmatprep.subr.mxu0 0.0
  %1154 = vmatpush1.msra.mxu0 0.0
  %1155 = vmatprep.subr.mxu0 0.0
  %1156 = vmatpush1.msra.mxu0 0.0
  %1157 = vmatprep.subr.mxu0 0.0
  %1158 = vmatpush1.msra.mxu0 0.0
  %1159 = vmatprep.subr.mxu0 0.0
  %1160 = vmatpush1.msra.mxu0 0.0
  %1161 = vmatprep.subr.mxu0 0.0
  %1162 = vmatpush1.msra.mxu0 0.0
  %1163 = vmatprep.subr.mxu0 0.0
  %1164 = vmatpush1.msra.mxu0 0.0
  %1165 = vmatprep.subr.mxu0 0.0
  %1166 = vmatpush1.msra.mxu0 0.0
  %1167 = vmatprep.subr.mxu0 0.0
  %1168 = vmatpush1.msra.mxu0 0.0
  %1169 = vmatprep.subr.mxu0 0.0
  %1170 = vmatpush1.msra.mxu0 0.0
  %1171 = vmatprep.mubr.f32.mxu0 0.0
  %1172 = vmatmul.mubr.f32.gmra.mrb[0].mxu0 %v1084
  %v1173 = vpop.f32.mrb[0].mxu0
  %v1174 = vadd.f32 %v1081, %v1173
  %v1175 = vpop.f32.mrb[0].mxu0
  %1176 = vmatprep.mubr.f32.mxu0 0.0
  %1177 = vmatmul.mubr.f32.gmra.mrb[0].mxu0 %v1087
  %v1178 = vpop.f32.mrb[0].mxu0
  %v1179 = vadd.f32 %v1081, %v1178
  %v1180 = vpop.f32.mrb[0].mxu0
  %1181 = vmatprep.mubr.f32.mxu0 0.0
  %1182 = vmatmul.mubr.f32.gmra.mrb[0].mxu0 %v1090
  %v1183 = vpop.f32.mrb[0].mxu0
  %v1184 = vadd.f32 %v1081, %v1183
  %v1185 = vpop.f32.mrb[0].mxu0
  %1186 = vmatprep.mubr.f32.mxu0 0.0
  %1187 = vmatmul.mubr.f32.gmra.mrb[0].mxu0 %v1093
  %v1188 = vpop.f32.mrb[0].mxu0
  %v1189 = vadd.f32 %v1081, %v1188
  %v1190 = vpop.f32.mrb[0].mxu0
  %1191 = vmatprep.mubr.f32.mxu0 0.0
  %1192 = vmatmul.mubr.f32.gmra.mrb[0].mxu0 %v1096
  %v1193 = vpop.f32.mrb[0].mxu0
  %v1194 = vadd.f32 %v1081, %v1193
  %v1195 = vpop.f32.mrb[0].mxu0
  %1196 = vmatprep.mubr.f32.mxu0 0.0
  %1197 = vmatmul.mubr.f32.gmra.mrb[0].mxu0 %v1099
  %v1198 = vpop.f32.mrb[0].mxu0
  %v1199 = vadd.f32 %v1081, %v1198
  %v1200 = vpop.f32.mrb[0].mxu0
  %1201 = vmatprep.mubr.f32.mxu0 0.0
  %1202 = vmatmul.mubr.f32.gmra.mrb[0].mxu0 %v1102
  %v1203 = vpop.f32.mrb[0].mxu0
  %v1204 = vadd.f32 %v1081, %v1203
  %v1205 = vpop.f32.mrb[0].mxu0
  %1206 = vmatprep.mubr.f32.mxu0 0.0
  %1207 = vmatmul.mubr.f32.gmra.mrb[0].mxu0 %v1105
  %v1208 = vpop.f32.mrb[0].mxu0
  %v1209 = vadd.f32 %v1081, %v1208
  %v1210 = vpop.f32.mrb[0].mxu0
  %1211 = vdwg.mxu0
  %v1212 = vtanh.pop %v1174
  %v1213 = vtanh.pop %v1179
  %v1214 = vtanh.pop %v1184
  %v1215 = vtanh.pop %v1189
  %v1216 = vtanh.pop %v1194
  %v1217 = vtanh.pop %v1199
  %v1218 = vtanh.pop %v1204
  %v1219 = vtanh.pop %v1209
  %s1220 = scalar_lea.vmem %s8, 64
  %1221 = vst.msk [vmem:[%s1220] sm:$0xff] %vm186, %v1212
  %1222 = vst.msk [vmem:[%s1220 + $0x8] sm:$0xff] %vm186, %v1213
  %1223 = vst.msk [vmem:[%s1220 + $0x10] sm:$0xff] %vm186, %v1214
  %1224 = vst.msk [vmem:[%s1220 + $0x18] sm:$0xff] %vm186, %v1215
  %1225 = vst.msk [vmem:[%s1220 + $0x20] sm:$0xff] %vm186, %v1216
  %1226 = vst.msk [vmem:[%s1220 + $0x28] sm:$0xff] %vm186, %v1217
  %1227 = vst.msk [vmem:[%s1220 + $0x30] sm:$0xff] %vm186, %v1218
  %1228 = vst.msk [vmem:[%s1220 + $0x38] sm:$0xff] %vm186, %v1219
  %v1229 = vand.u32 2147483647, %v1212
  %v1230 = vand.u32 2147483647, %v1213
  %v1231 = vand.u32 2147483647, %v1214
  %v1232 = vand.u32 2147483647, %v1215
  %v1233 = vand.u32 2147483647, %v1216
  %v1234 = vand.u32 2147483647, %v1217
  %v1235 = vand.u32 2147483647, %v1218
  %v1236 = vand.u32 2147483647, %v1219
  %v1237 = vsel %vm186, %v1229, 0.0
  %1238 = vadd.xlane.f32.xlu0 %v1237
  %v1239 = vpop.xlane.xlu0 %1238
  %v1240 = vsel %vm186, %v1230, 0.0
  %1241 = vadd.xlane.f32.xlu0 %v1240
  %v1242 = vpop.xlane.xlu0 %1241
  %v1243 = vsel %vm186, %v1231, 0.0
  %1244 = vadd.xlane.f32.xlu0 %v1243
  %v1245 = vpop.xlane.xlu0 %1244
  %v1246 = vsel %vm186, %v1232, 0.0
  %1247 = vadd.xlane.f32.xlu0 %v1246
  %v1248 = vpop.xlane.xlu0 %1247
  %v1249 = vsel %vm186, %v1233, 0.0
  %1250 = vadd.xlane.f32.xlu0 %v1249
  %v1251 = vpop.xlane.xlu0 %1250
  %v1252 = vsel %vm186, %v1234, 0.0
  %1253 = vadd.xlane.f32.xlu0 %v1252
  %v1254 = vpop.xlane.xlu0 %1253
  %v1255 = vsel %vm186, %v1235, 0.0
  %1256 = vadd.xlane.f32.xlu0 %v1255
  %v1257 = vpop.xlane.xlu0 %1256
  %v1258 = vsel %vm186, %v1236, 0.0
  %1259 = vadd.xlane.f32.xlu0 %v1258
  %v1260 = vpop.xlane.xlu0 %1259
  %v1261 = vmul.f32 %v1239, %v227
  %v1262 = vmul.f32 %v1242, %v227
  %v1263 = vmul.f32 %v1245, %v227
  %v1264 = vmul.f32 %v1248, %v227
  %v1265 = vmul.f32 %v1251, %v227
  %v1266 = vmul.f32 %v1254, %v227
  %v1267 = vmul.f32 %v1257, %v227
  %v1268 = vmul.f32 %v1260, %v227
  %vm1269 = vcmp.ge.f32.partialorder %v1261, 0.1
  %vm1270 = vcmp.ge.f32.partialorder %v1262, 0.1
  %vm1271 = vcmp.ge.f32.partialorder %v1263, 0.1
  %vm1272 = vcmp.ge.f32.partialorder %v1264, 0.1
  %vm1273 = vcmp.ge.f32.partialorder %v1265, 0.1
  %vm1274 = vcmp.ge.f32.partialorder %v1266, 0.1
  %vm1275 = vcmp.ge.f32.partialorder %v1267, 0.1
  %vm1276 = vcmp.ge.f32.partialorder %v1268, 0.1
  %v1277 = vsel %vm1269, 1, 0
  %v1278 = vsel %vm1270, 1, 0
  %v1279 = vsel %vm1271, 1, 0
  %v1280 = vsel %vm1272, 1, 0
  %v1281 = vsel %vm1273, 1, 0
  %v1282 = vsel %vm1274, 1, 0
  %v1283 = vsel %vm1275, 1, 0
  %v1284 = vsel %vm1276, 1, 0
  %v1285 = vcvt.s32.f32 %v1277
  %v1286 = vcvt.s32.f32 %v1278
  %v1287 = vcvt.s32.f32 %v1279
  %v1288 = vcvt.s32.f32 %v1280
  %v1289 = vcvt.s32.f32 %v1281
  %v1290 = vcvt.s32.f32 %v1282
  %v1291 = vcvt.s32.f32 %v1283
  %v1292 = vcvt.s32.f32 %v1284
  %v1293 = vmul.f32 %v1064, %v1285
  %v1294 = vmul.f32 %v1065, %v1286
  %v1295 = vmul.f32 %v1066, %v1287
  %v1296 = vmul.f32 %v1067, %v1288
  %v1297 = vmul.f32 %v1068, %v1289
  %v1298 = vmul.f32 %v1069, %v1290
  %v1299 = vmul.f32 %v1070, %v1291
  %v1300 = vmul.f32 %v1071, %v1292
  %s1301 = scalar_lea.vmem %s1, 64
  %v1302 = vld [vmem:[%s1301] sm:$0xff]
  %v1303 = vld [vmem:[%s1301 + $0x8] sm:$0xff]
  %v1304 = vld [vmem:[%s1301 + $0x10] sm:$0xff]
  %v1305 = vld [vmem:[%s1301 + $0x18] sm:$0xff]
  %v1306 = vld [vmem:[%s1301 + $0x20] sm:$0xff]
  %v1307 = vld [vmem:[%s1301 + $0x28] sm:$0xff]
  %v1308 = vld [vmem:[%s1301 + $0x30] sm:$0xff]
  %v1309 = vld [vmem:[%s1301 + $0x38] sm:$0xff]
  %v1311 = vsel %vm48, %v1302, 0
  %v1314 = vsel %vm48, %v1303, 0
  %1316 = vmatprep.subr.mxu0 0.0
  %1317 = vmatpush1.msra.mxu0 %v1293
  %1318 = vmatprep.subr.mxu0 0.0
  %1319 = vmatpush1.msra.mxu0 %v1294
  %1320 = vmatprep.subr.mxu0 0.0
  %1321 = vmatpush1.msra.mxu0 0.0
  %1322 = vmatprep.subr.mxu0 0.0
  %1323 = vmatpush1.msra.mxu0 0.0
  %1324 = vmatprep.subr.mxu0 0.0
  %1325 = vmatpush1.msra.mxu0 0.0
  %1326 = vmatprep.subr.mxu0 0.0
  %1327 = vmatpush1.msra.mxu0 0.0
  %1328 = vmatprep.subr.mxu0 0.0
  %1329 = vmatpush1.msra.mxu0 0.0
  %1330 = vmatprep.subr.mxu0 0.0
  %1331 = vmatpush1.msra.mxu0 0.0
  %1332 = vmatprep.subr.mxu0 0.0
  %1333 = vmatpush1.msra.mxu0 0.0
  %1334 = vmatprep.subr.mxu0 0.0
  %1335 = vmatpush1.msra.mxu0 0.0
  %1336 = vmatprep.subr.mxu0 0.0
  %1337 = vmatpush1.msra.mxu0 0.0
  %1338 = vmatprep.subr.mxu0 0.0
  %1339 = vmatpush1.msra.mxu0 0.0
  %1340 = vmatprep.subr.mxu0 0.0
  %1341 = vmatpush1.msra.mxu0 0.0
  %1342 = vmatprep.subr.mxu0 0.0
  %1343 = vmatpush1.msra.mxu0 0.0
  %1344 = vmatprep.subr.mxu0 0.0
  %1345 = vmatpush1.msra.mxu0 0.0
  %1346 = vmatprep.subr.mxu0 0.0
  %1347 = vmatpush1.msra.mxu0 0.0
  %1348 = vmatprep.subr.mxu0 0.0
  %1349 = vmatpush1.msra.mxu0 0.0
  %1350 = vmatprep.subr.mxu0 0.0
  %1351 = vmatpush1.msra.mxu0 0.0
  %1352 = vmatprep.subr.mxu0 0.0
  %1353 = vmatpush1.msra.mxu0 0.0
  %1354 = vmatprep.subr.mxu0 0.0
  %1355 = vmatpush1.msra.mxu0 0.0
  %1356 = vmatprep.subr.mxu0 0.0
  %1357 = vmatpush1.msra.mxu0 0.0
  %1358 = vmatprep.subr.mxu0 0.0
  %1359 = vmatpush1.msra.mxu0 0.0
  %1360 = vmatprep.subr.mxu0 0.0
  %1361 = vmatpush1.msra.mxu0 0.0
  %1362 = vmatprep.subr.mxu0 0.0
  %1363 = vmatpush1.msra.mxu0 0.0
  %1364 = vmatprep.subr.mxu0 0.0
  %1365 = vmatpush1.msra.mxu0 0.0
  %1366 = vmatprep.subr.mxu0 0.0
  %1367 = vmatpush1.msra.mxu0 0.0
  %1368 = vmatprep.subr.mxu0 0.0
  %1369 = vmatpush1.msra.mxu0 0.0
  %1370 = vmatprep.subr.mxu0 0.0
  %1371 = vmatpush1.msra.mxu0 0.0
  %1372 = vmatprep.subr.mxu0 0.0
  %1373 = vmatpush1.msra.mxu0 0.0
  %1374 = vmatprep.subr.mxu0 0.0
  %1375 = vmatpush1.msra.mxu0 0.0
  %1376 = vmatprep.subr.mxu0 0.0
  %1377 = vmatpush1.msra.mxu0 0.0
  %1378 = vmatprep.subr.mxu0 0.0
  %1379 = vmatpush1.msra.mxu0 0.0
  %1380 = vmatprep.mubr.f32.mxu0 0.0
  %1381 = vmatmul.mubr.f32.gmra.mrb[0].mxu0 %v1311
  %v1382 = vpop.f32.mrb[0].mxu0
  %v1383 = vadd.f32 0.0, %v1382
  %v1384 = vpop.f32.mrb[0].mxu0
  %1385 = vmatprep.mubr.f32.mxu0 0.0
  %1386 = vmatmul.mubr.f32.gmra.mrb[0].mxu0 %v1314
  %v1387 = vpop.f32.mrb[0].mxu0
  %v1388 = vadd.f32 0.0, %v1387
  %v1389 = vpop.f32.mrb[0].mxu0
  %1390 = vdwg.mxu0
  %v1392 = vsel %vm48, %v1304, 0
  %v1395 = vsel %vm48, %v1305, 0
  %1397 = vmatprep.subr.mxu0 0.0
  %1398 = vmatpush1.msra.mxu0 %v1295
  %1399 = vmatprep.subr.mxu0 0.0
  %1400 = vmatpush1.msra.mxu0 %v1296
  %1401 = vmatprep.subr.mxu0 0.0
  %1402 = vmatpush1.msra.mxu0 0.0
  %1403 = vmatprep.subr.mxu0 0.0
  %1404 = vmatpush1.msra.mxu0 0.0
  %1405 = vmatprep.subr.mxu0 0.0
  %1406 = vmatpush1.msra.mxu0 0.0
  %1407 = vmatprep.subr.mxu0 0.0
  %1408 = vmatpush1.msra.mxu0 0.0
  %1409 = vmatprep.subr.mxu0 0.0
  %1410 = vmatpush1.msra.mxu0 0.0
  %1411 = vmatprep.subr.mxu0 0.0
  %1412 = vmatpush1.msra.mxu0 0.0
  %1413 = vmatprep.subr.mxu0 0.0
  %1414 = vmatpush1.msra.mxu0 0.0
  %1415 = vmatprep.subr.mxu0 0.0
  %1416 = vmatpush1.msra.mxu0 0.0
  %1417 = vmatprep.subr.mxu0 0.0
  %1418 = vmatpush1.msra.mxu0 0.0
  %1419 = vmatprep.subr.mxu0 0.0
  %1420 = vmatpush1.msra.mxu0 0.0
  %1421 = vmatprep.subr.mxu0 0.0
  %1422 = vmatpush1.msra.mxu0 0.0
  %1423 = vmatprep.subr.mxu0 0.0
  %1424 = vmatpush1.msra.mxu0 0.0
  %1425 = vmatprep.subr.mxu0 0.0
  %1426 = vmatpush1.msra.mxu0 0.0
  %1427 = vmatprep.subr.mxu0 0.0
  %1428 = vmatpush1.msra.mxu0 0.0
  %1429 = vmatprep.subr.mxu0 0.0
  %1430 = vmatpush1.msra.mxu0 0.0
  %1431 = vmatprep.subr.mxu0 0.0
  %1432 = vmatpush1.msra.mxu0 0.0
  %1433 = vmatprep.subr.mxu0 0.0
  %1434 = vmatpush1.msra.mxu0 0.0
  %1435 = vmatprep.subr.mxu0 0.0
  %1436 = vmatpush1.msra.mxu0 0.0
  %1437 = vmatprep.subr.mxu0 0.0
  %1438 = vmatpush1.msra.mxu0 0.0
  %1439 = vmatprep.subr.mxu0 0.0
  %1440 = vmatpush1.msra.mxu0 0.0
  %1441 = vmatprep.subr.mxu0 0.0
  %1442 = vmatpush1.msra.mxu0 0.0
  %1443 = vmatprep.subr.mxu0 0.0
  %1444 = vmatpush1.msra.mxu0 0.0
  %1445 = vmatprep.subr.mxu0 0.0
  %1446 = vmatpush1.msra.mxu0 0.0
  %1447 = vmatprep.subr.mxu0 0.0
  %1448 = vmatpush1.msra.mxu0 0.0
  %1449 = vmatprep.subr.mxu0 0.0
  %1450 = vmatpush1.msra.mxu0 0.0
  %1451 = vmatprep.subr.mxu0 0.0
  %1452 = vmatpush1.msra.mxu0 0.0
  %1453 = vmatprep.subr.mxu0 0.0
  %1454 = vmatpush1.msra.mxu0 0.0
  %1455 = vmatprep.subr.mxu0 0.0
  %1456 = vmatpush1.msra.mxu0 0.0
  %1457 = vmatprep.subr.mxu0 0.0
  %1458 = vmatpush1.msra.mxu0 0.0
  %1459 = vmatprep.subr.mxu0 0.0
  %1460 = vmatpush1.msra.mxu0 0.0
  %1461 = vmatprep.mubr.f32.mxu0 0.0
  %1462 = vmatmul.mubr.f32.gmra.mrb[0].mxu0 %v1392
  %v1463 = vpop.f32.mrb[0].mxu0
  %v1464 = vadd.f32 0.0, %v1463
  %v1465 = vpop.f32.mrb[0].mxu0
  %1466 = vmatprep.mubr.f32.mxu0 0.0
  %1467 = vmatmul.mubr.f32.gmra.mrb[0].mxu0 %v1395
  %v1468 = vpop.f32.mrb[0].mxu0
  %v1469 = vadd.f32 0.0, %v1468
  %v1470 = vpop.f32.mrb[0].mxu0
  %1471 = vdwg.mxu0
  %v1473 = vsel %vm48, %v1306, 0
  %v1476 = vsel %vm48, %v1307, 0
  %1478 = vmatprep.subr.mxu0 0.0
  %1479 = vmatpush1.msra.mxu0 %v1297
  %1480 = vmatprep.subr.mxu0 0.0
  %1481 = vmatpush1.msra.mxu0 %v1298
  %1482 = vmatprep.subr.mxu0 0.0
  %1483 = vmatpush1.msra.mxu0 0.0
  %1484 = vmatprep.subr.mxu0 0.0
  %1485 = vmatpush1.msra.mxu0 0.0
  %1486 = vmatprep.subr.mxu0 0.0
  %1487 = vmatpush1.msra.mxu0 0.0
  %1488 = vmatprep.subr.mxu0 0.0
  %1489 = vmatpush1.msra.mxu0 0.0
  %1490 = vmatprep.subr.mxu0 0.0
  %1491 = vmatpush1.msra.mxu0 0.0
  %1492 = vmatprep.subr.mxu0 0.0
  %1493 = vmatpush1.msra.mxu0 0.0
  %1494 = vmatprep.subr.mxu0 0.0
  %1495 = vmatpush1.msra.mxu0 0.0
  %1496 = vmatprep.subr.mxu0 0.0
  %1497 = vmatpush1.msra.mxu0 0.0
  %1498 = vmatprep.subr.mxu0 0.0
  %1499 = vmatpush1.msra.mxu0 0.0
  %1500 = vmatprep.subr.mxu0 0.0
  %1501 = vmatpush1.msra.mxu0 0.0
  %1502 = vmatprep.subr.mxu0 0.0
  %1503 = vmatpush1.msra.mxu0 0.0
  %1504 = vmatprep.subr.mxu0 0.0
  %1505 = vmatpush1.msra.mxu0 0.0
  %1506 = vmatprep.subr.mxu0 0.0
  %1507 = vmatpush1.msra.mxu0 0.0
  %1508 = vmatprep.subr.mxu0 0.0
  %1509 = vmatpush1.msra.mxu0 0.0
  %1510 = vmatprep.subr.mxu0 0.0
  %1511 = vmatpush1.msra.mxu0 0.0
  %1512 = vmatprep.subr.mxu0 0.0
  %1513 = vmatpush1.msra.mxu0 0.0
  %1514 = vmatprep.subr.mxu0 0.0
  %1515 = vmatpush1.msra.mxu0 0.0
  %1516 = vmatprep.subr.mxu0 0.0
  %1517 = vmatpush1.msra.mxu0 0.0
  %1518 = vmatprep.subr.mxu0 0.0
  %1519 = vmatpush1.msra.mxu0 0.0
  %1520 = vmatprep.subr.mxu0 0.0
  %1521 = vmatpush1.msra.mxu0 0.0
  %1522 = vmatprep.subr.mxu0 0.0
  %1523 = vmatpush1.msra.mxu0 0.0
  %1524 = vmatprep.subr.mxu0 0.0
  %1525 = vmatpush1.msra.mxu0 0.0
  %1526 = vmatprep.subr.mxu0 0.0
  %1527 = vmatpush1.msra.mxu0 0.0
  %1528 = vmatprep.subr.mxu0 0.0
  %1529 = vmatpush1.msra.mxu0 0.0
  %1530 = vmatprep.subr.mxu0 0.0
  %1531 = vmatpush1.msra.mxu0 0.0
  %1532 = vmatprep.subr.mxu0 0.0
  %1533 = vmatpush1.msra.mxu0 0.0
  %1534 = vmatprep.subr.mxu0 0.0
  %1535 = vmatpush1.msra.mxu0 0.0
  %1536 = vmatprep.subr.mxu0 0.0
  %1537 = vmatpush1.msra.mxu0 0.0
  %1538 = vmatprep.subr.mxu0 0.0
  %1539 = vmatpush1.msra.mxu0 0.0
  %1540 = vmatprep.subr.mxu0 0.0
  %1541 = vmatpush1.msra.mxu0 0.0
  %1542 = vmatprep.mubr.f32.mxu0 0.0
  %1543 = vmatmul.mubr.f32.gmra.mrb[0].mxu0 %v1473
  %v1544 = vpop.f32.mrb[0].mxu0
  %v1545 = vadd.f32 0.0, %v1544
  %v1546 = vpop.f32.mrb[0].mxu0
  %1547 = vmatprep.mubr.f32.mxu0 0.0
  %1548 = vmatmul.mubr.f32.gmra.mrb[0].mxu0 %v1476
  %v1549 = vpop.f32.mrb[0].mxu0
  %v1550 = vadd.f32 0.0, %v1549
  %v1551 = vpop.f32.mrb[0].mxu0
  %1552 = vdwg.mxu0
  %v1554 = vsel %vm48, %v1308, 0
  %v1557 = vsel %vm48, %v1309, 0
  %1559 = vmatprep.subr.mxu0 0.0
  %1560 = vmatpush1.msra.mxu0 %v1299
  %1561 = vmatprep.subr.mxu0 0.0
  %1562 = vmatpush1.msra.mxu0 %v1300
  %1563 = vmatprep.subr.mxu0 0.0
  %1564 = vmatpush1.msra.mxu0 0.0
  %1565 = vmatprep.subr.mxu0 0.0
  %1566 = vmatpush1.msra.mxu0 0.0
  %1567 = vmatprep.subr.mxu0 0.0
  %1568 = vmatpush1.msra.mxu0 0.0
  %1569 = vmatprep.subr.mxu0 0.0
  %1570 = vmatpush1.msra.mxu0 0.0
  %1571 = vmatprep.subr.mxu0 0.0
  %1572 = vmatpush1.msra.mxu0 0.0
  %1573 = vmatprep.subr.mxu0 0.0
  %1574 = vmatpush1.msra.mxu0 0.0
  %1575 = vmatprep.subr.mxu0 0.0
  %1576 = vmatpush1.msra.mxu0 0.0
  %1577 = vmatprep.subr.mxu0 0.0
  %1578 = vmatpush1.msra.mxu0 0.0
  %1579 = vmatprep.subr.mxu0 0.0
  %1580 = vmatpush1.msra.mxu0 0.0
  %1581 = vmatprep.subr.mxu0 0.0
  %1582 = vmatpush1.msra.mxu0 0.0
  %1583 = vmatprep.subr.mxu0 0.0
  %1584 = vmatpush1.msra.mxu0 0.0
  %1585 = vmatprep.subr.mxu0 0.0
  %1586 = vmatpush1.msra.mxu0 0.0
  %1587 = vmatprep.subr.mxu0 0.0
  %1588 = vmatpush1.msra.mxu0 0.0
  %1589 = vmatprep.subr.mxu0 0.0
  %1590 = vmatpush1.msra.mxu0 0.0
  %1591 = vmatprep.subr.mxu0 0.0
  %1592 = vmatpush1.msra.mxu0 0.0
  %1593 = vmatprep.subr.mxu0 0.0
  %1594 = vmatpush1.msra.mxu0 0.0
  %1595 = vmatprep.subr.mxu0 0.0
  %1596 = vmatpush1.msra.mxu0 0.0
  %1597 = vmatprep.subr.mxu0 0.0
  %1598 = vmatpush1.msra.mxu0 0.0
  %1599 = vmatprep.subr.mxu0 0.0
  %1600 = vmatpush1.msra.mxu0 0.0
  %1601 = vmatprep.subr.mxu0 0.0
  %1602 = vmatpush1.msra.mxu0 0.0
  %1603 = vmatprep.subr.mxu0 0.0
  %1604 = vmatpush1.msra.mxu0 0.0
  %1605 = vmatprep.subr.mxu0 0.0
  %1606 = vmatpush1.msra.mxu0 0.0
  %1607 = vmatprep.subr.mxu0 0.0
  %1608 = vmatpush1.msra.mxu0 0.0
  %1609 = vmatprep.subr.mxu0 0.0
  %1610 = vmatpush1.msra.mxu0 0.0
  %1611 = vmatprep.subr.mxu0 0.0
  %1612 = vmatpush1.msra.mxu0 0.0
  %1613 = vmatprep.subr.mxu0 0.0
  %1614 = vmatpush1.msra.mxu0 0.0
  %1615 = vmatprep.subr.mxu0 0.0
  %1616 = vmatpush1.msra.mxu0 0.0
  %1617 = vmatprep.subr.mxu0 0.0
  %1618 = vmatpush1.msra.mxu0 0.0
  %1619 = vmatprep.subr.mxu0 0.0
  %1620 = vmatpush1.msra.mxu0 0.0
  %1621 = vmatprep.subr.mxu0 0.0
  %1622 = vmatpush1.msra.mxu0 0.0
  %1623 = vmatprep.mubr.f32.mxu0 0.0
  %1624 = vmatmul.mubr.f32.gmra.mrb[0].mxu0 %v1554
  %v1625 = vpop.f32.mrb[0].mxu0
  %v1626 = vadd.f32 0.0, %v1625
  %v1627 = vpop.f32.mrb[0].mxu0
  %1628 = vmatprep.mubr.f32.mxu0 0.0
  %1629 = vmatmul.mubr.f32.gmra.mrb[0].mxu0 %v1557
  %v1630 = vpop.f32.mrb[0].mxu0
  %v1631 = vadd.f32 0.0, %v1630
  %v1632 = vpop.f32.mrb[0].mxu0
  %1633 = vdwg.mxu0
  %s1634 = scalar_lea.vmem %s4, 16
  %v1635 = vld [vmem:[%s1634] sm:$0xff]
  %v1636 = vld [vmem:[%s1634 + $0x8] sm:$0xff]
  %v1638 = vsel %vm48, %v1383, 0
  %v1641 = vsel %vm48, %v1388, 0
  %v1644 = vsel %vm48, %v1464, 0
  %v1647 = vsel %vm48, %v1469, 0
  %v1650 = vsel %vm48, %v1545, 0
  %v1653 = vsel %vm48, %v1550, 0
  %v1656 = vsel %vm48, %v1626, 0
  %v1659 = vsel %vm48, %v1631, 0
  %1661 = vmatprep.subr.mxu0 0.0
  %1662 = vmatpush1.msra.mxu0 %v1635
  %1663 = vmatprep.subr.mxu0 0.0
  %1664 = vmatpush1.msra.mxu0 %v1636
  %1665 = vmatprep.subr.mxu0 0.0
  %1666 = vmatpush1.msra.mxu0 0.0
  %1667 = vmatprep.subr.mxu0 0.0
  %1668 = vmatpush1.msra.mxu0 0.0
  %1669 = vmatprep.subr.mxu0 0.0
  %1670 = vmatpush1.msra.mxu0 0.0
  %1671 = vmatprep.subr.mxu0 0.0
  %1672 = vmatpush1.msra.mxu0 0.0
  %1673 = vmatprep.subr.mxu0 0.0
  %1674 = vmatpush1.msra.mxu0 0.0
  %1675 = vmatprep.subr.mxu0 0.0
  %1676 = vmatpush1.msra.mxu0 0.0
  %1677 = vmatprep.subr.mxu0 0.0
  %1678 = vmatpush1.msra.mxu0 0.0
  %1679 = vmatprep.subr.mxu0 0.0
  %1680 = vmatpush1.msra.mxu0 0.0
  %1681 = vmatprep.subr.mxu0 0.0
  %1682 = vmatpush1.msra.mxu0 0.0
  %1683 = vmatprep.subr.mxu0 0.0
  %1684 = vmatpush1.msra.mxu0 0.0
  %1685 = vmatprep.subr.mxu0 0.0
  %1686 = vmatpush1.msra.mxu0 0.0
  %1687 = vmatprep.subr.mxu0 0.0
  %1688 = vmatpush1.msra.mxu0 0.0
  %1689 = vmatprep.subr.mxu0 0.0
  %1690 = vmatpush1.msra.mxu0 0.0
  %1691 = vmatprep.subr.mxu0 0.0
  %1692 = vmatpush1.msra.mxu0 0.0
  %1693 = vmatprep.subr.mxu0 0.0
  %1694 = vmatpush1.msra.mxu0 0.0
  %1695 = vmatprep.subr.mxu0 0.0
  %1696 = vmatpush1.msra.mxu0 0.0
  %1697 = vmatprep.subr.mxu0 0.0
  %1698 = vmatpush1.msra.mxu0 0.0
  %1699 = vmatprep.subr.mxu0 0.0
  %1700 = vmatpush1.msra.mxu0 0.0
  %1701 = vmatprep.subr.mxu0 0.0
  %1702 = vmatpush1.msra.mxu0 0.0
  %1703 = vmatprep.subr.mxu0 0.0
  %1704 = vmatpush1.msra.mxu0 0.0
  %1705 = vmatprep.subr.mxu0 0.0
  %1706 = vmatpush1.msra.mxu0 0.0
  %1707 = vmatprep.subr.mxu0 0.0
  %1708 = vmatpush1.msra.mxu0 0.0
  %1709 = vmatprep.subr.mxu0 0.0
  %1710 = vmatpush1.msra.mxu0 0.0
  %1711 = vmatprep.subr.mxu0 0.0
  %1712 = vmatpush1.msra.mxu0 0.0
  %1713 = vmatprep.subr.mxu0 0.0
  %1714 = vmatpush1.msra.mxu0 0.0
  %1715 = vmatprep.subr.mxu0 0.0
  %1716 = vmatpush1.msra.mxu0 0.0
  %1717 = vmatprep.subr.mxu0 0.0
  %1718 = vmatpush1.msra.mxu0 0.0
  %1719 = vmatprep.subr.mxu0 0.0
  %1720 = vmatpush1.msra.mxu0 0.0
  %1721 = vmatprep.subr.mxu0 0.0
  %1722 = vmatpush1.msra.mxu0 0.0
  %1723 = vmatprep.subr.mxu0 0.0
  %1724 = vmatpush1.msra.mxu0 0.0
  %1725 = vmatprep.mubr.f32.mxu0 0.0
  %1726 = vmatmul.mubr.f32.gmra.mrb[0].mxu0 %v1638
  %v1727 = vpop.f32.mrb[0].mxu0
  %v1728 = vadd.f32 0.0, %v1727
  %v1729 = vpop.f32.mrb[0].mxu0
  %1730 = vmatprep.mubr.f32.mxu0 0.0
  %1731 = vmatmul.mubr.f32.gmra.mrb[0].mxu0 %v1641
  %v1732 = vpop.f32.mrb[0].mxu0
  %v1733 = vadd.f32 0.0, %v1732
  %v1734 = vpop.f32.mrb[0].mxu0
  %1735 = vmatprep.mubr.f32.mxu0 0.0
  %1736 = vmatmul.mubr.f32.gmra.mrb[0].mxu0 %v1644
  %v1737 = vpop.f32.mrb[0].mxu0
  %v1738 = vadd.f32 0.0, %v1737
  %v1739 = vpop.f32.mrb[0].mxu0
  %1740 = vmatprep.mubr.f32.mxu0 0.0
  %1741 = vmatmul.mubr.f32.gmra.mrb[0].mxu0 %v1647
  %v1742 = vpop.f32.mrb[0].mxu0
  %v1743 = vadd.f32 0.0, %v1742
  %v1744 = vpop.f32.mrb[0].mxu0
  %1745 = vmatprep.mubr.f32.mxu0 0.0
  %1746 = vmatmul.mubr.f32.gmra.mrb[0].mxu0 %v1650
  %v1747 = vpop.f32.mrb[0].mxu0
  %v1748 = vadd.f32 0.0, %v1747
  %v1749 = vpop.f32.mrb[0].mxu0
  %1750 = vmatprep.mubr.f32.mxu0 0.0
  %1751 = vmatmul.mubr.f32.gmra.mrb[0].mxu0 %v1653
  %v1752 = vpop.f32.mrb[0].mxu0
  %v1753 = vadd.f32 0.0, %v1752
  %v1754 = vpop.f32.mrb[0].mxu0
  %1755 = vmatprep.mubr.f32.mxu0 0.0
  %1756 = vmatmul.mubr.f32.gmra.mrb[0].mxu0 %v1656
  %v1757 = vpop.f32.mrb[0].mxu0
  %v1758 = vadd.f32 0.0, %v1757
  %v1759 = vpop.f32.mrb[0].mxu0
  %1760 = vmatprep.mubr.f32.mxu0 0.0
  %1761 = vmatmul.mubr.f32.gmra.mrb[0].mxu0 %v1659
  %v1762 = vpop.f32.mrb[0].mxu0
  %v1763 = vadd.f32 0.0, %v1762
  %v1764 = vpop.f32.mrb[0].mxu0
  %1765 = vdwg.mxu0
  %vm1766 = vcmp.gt.f32.partialorder %v1728, 0.0
  %vm1767 = vcmp.gt.f32.partialorder %v1733, 0.0
  %vm1768 = vcmp.gt.f32.partialorder %v1738, 0.0
  %vm1769 = vcmp.gt.f32.partialorder %v1743, 0.0
  %vm1770 = vcmp.gt.f32.partialorder %v1748, 0.0
  %vm1771 = vcmp.gt.f32.partialorder %v1753, 0.0
  %vm1772 = vcmp.gt.f32.partialorder %v1758, 0.0
  %vm1773 = vcmp.gt.f32.partialorder %v1763, 0.0
  %v1774 = vmul.f32 %v1728, 0.2
  %v1775 = vmul.f32 %v1733, 0.2
  %v1776 = vmul.f32 %v1738, 0.2
  %v1777 = vmul.f32 %v1743, 0.2
  %v1778 = vmul.f32 %v1748, 0.2
  %v1779 = vmul.f32 %v1753, 0.2
  %v1780 = vmul.f32 %v1758, 0.2
  %v1781 = vmul.f32 %v1763, 0.2
  %v1782 = vsel %vm1766, %v1728, %v1774
  %v1783 = vsel %vm1767, %v1733, %v1775
  %v1784 = vsel %vm1768, %v1738, %v1776
  %v1785 = vsel %vm1769, %v1743, %v1777
  %v1786 = vsel %vm1770, %v1748, %v1778
  %v1787 = vsel %vm1771, %v1753, %v1779
  %v1788 = vsel %vm1772, %v1758, %v1780
  %v1789 = vsel %vm1773, %v1763, %v1781
  %v1790 = vld [vmem:[%s5] sm:$0xff]
  %v1791 = vld [vmem:[%s5 + $0x8] sm:$0xff]
  %v1792 = vld [vmem:[%s5 + $0x10] sm:$0xff]
  %v1793 = vld [vmem:[%s5 + $0x18] sm:$0xff]
  %v1794 = vld [vmem:[%s6] sm:$0x1]
  %v1796 = vlaneseq
  %v1797 = vshrl.u32 %v1796, 7
  %v1798 = vsub.s32 0, %v1797
  %v1799 = vrot.slane %v1794, %v1798
  %v1802 = vsel %vm766, %v1782, 0
  %v1805 = vsel %vm766, %v1783, 0
  %v1808 = vsel %vm766, %v1784, 0
  %v1811 = vsel %vm766, %v1785, 0
  %v1814 = vsel %vm766, %v1786, 0
  %v1817 = vsel %vm766, %v1787, 0
  %v1820 = vsel %vm766, %v1788, 0
  %v1823 = vsel %vm766, %v1789, 0
  %1825 = vmatprep.subr.mxu0 0.0
  %1826 = vmatpush1.msra.mxu0 %v1790
  %1827 = vmatprep.subr.mxu0 0.0
  %1828 = vmatpush1.msra.mxu0 %v1791
  %1829 = vmatprep.subr.mxu0 0.0
  %1830 = vmatpush1.msra.mxu0 %v1792
  %1831 = vmatprep.subr.mxu0 0.0
  %1832 = vmatpush1.msra.mxu0 %v1793
  %1833 = vmatprep.subr.mxu0 0.0
  %1834 = vmatpush1.msra.mxu0 0.0
  %1835 = vmatprep.subr.mxu0 0.0
  %1836 = vmatpush1.msra.mxu0 0.0
  %1837 = vmatprep.subr.mxu0 0.0
  %1838 = vmatpush1.msra.mxu0 0.0
  %1839 = vmatprep.subr.mxu0 0.0
  %1840 = vmatpush1.msra.mxu0 0.0
  %1841 = vmatprep.subr.mxu0 0.0
  %1842 = vmatpush1.msra.mxu0 0.0
  %1843 = vmatprep.subr.mxu0 0.0
  %1844 = vmatpush1.msra.mxu0 0.0
  %1845 = vmatprep.subr.mxu0 0.0
  %1846 = vmatpush1.msra.mxu0 0.0
  %1847 = vmatprep.subr.mxu0 0.0
  %1848 = vmatpush1.msra.mxu0 0.0
  %1849 = vmatprep.subr.mxu0 0.0
  %1850 = vmatpush1.msra.mxu0 0.0
  %1851 = vmatprep.subr.mxu0 0.0
  %1852 = vmatpush1.msra.mxu0 0.0
  %1853 = vmatprep.subr.mxu0 0.0
  %1854 = vmatpush1.msra.mxu0 0.0
  %1855 = vmatprep.subr.mxu0 0.0
  %1856 = vmatpush1.msra.mxu0 0.0
  %1857 = vmatprep.subr.mxu0 0.0
  %1858 = vmatpush1.msra.mxu0 0.0
  %1859 = vmatprep.subr.mxu0 0.0
  %1860 = vmatpush1.msra.mxu0 0.0
  %1861 = vmatprep.subr.mxu0 0.0
  %1862 = vmatpush1.msra.mxu0 0.0
  %1863 = vmatprep.subr.mxu0 0.0
  %1864 = vmatpush1.msra.mxu0 0.0
  %1865 = vmatprep.subr.mxu0 0.0
  %1866 = vmatpush1.msra.mxu0 0.0
  %1867 = vmatprep.subr.mxu0 0.0
  %1868 = vmatpush1.msra.mxu0 0.0
  %1869 = vmatprep.subr.mxu0 0.0
  %1870 = vmatpush1.msra.mxu0 0.0
  %1871 = vmatprep.subr.mxu0 0.0
  %1872 = vmatpush1.msra.mxu0 0.0
  %1873 = vmatprep.subr.mxu0 0.0
  %1874 = vmatpush1.msra.mxu0 0.0
  %1875 = vmatprep.subr.mxu0 0.0
  %1876 = vmatpush1.msra.mxu0 0.0
  %1877 = vmatprep.subr.mxu0 0.0
  %1878 = vmatpush1.msra.mxu0 0.0
  %1879 = vmatprep.subr.mxu0 0.0
  %1880 = vmatpush1.msra.mxu0 0.0
  %1881 = vmatprep.subr.mxu0 0.0
  %1882 = vmatpush1.msra.mxu0 0.0
  %1883 = vmatprep.subr.mxu0 0.0
  %1884 = vmatpush1.msra.mxu0 0.0
  %1885 = vmatprep.subr.mxu0 0.0
  %1886 = vmatpush1.msra.mxu0 0.0
  %1887 = vmatprep.subr.mxu0 0.0
  %1888 = vmatpush1.msra.mxu0 0.0
  %1889 = vmatprep.mubr.f32.mxu0 0.0
  %1890 = vmatmul.mubr.f32.gmra.mrb[0].mxu0 %v1802
  %v1891 = vpop.f32.mrb[0].mxu0
  %v1892 = vadd.f32 %v1799, %v1891
  %v1893 = vpop.f32.mrb[0].mxu0
  %1894 = vmatprep.mubr.f32.mxu0 0.0
  %1895 = vmatmul.mubr.f32.gmra.mrb[0].mxu0 %v1805
  %v1896 = vpop.f32.mrb[0].mxu0
  %v1897 = vadd.f32 %v1799, %v1896
  %v1898 = vpop.f32.mrb[0].mxu0
  %1899 = vmatprep.mubr.f32.mxu0 0.0
  %1900 = vmatmul.mubr.f32.gmra.mrb[0].mxu0 %v1808
  %v1901 = vpop.f32.mrb[0].mxu0
  %v1902 = vadd.f32 %v1799, %v1901
  %v1903 = vpop.f32.mrb[0].mxu0
  %1904 = vmatprep.mubr.f32.mxu0 0.0
  %1905 = vmatmul.mubr.f32.gmra.mrb[0].mxu0 %v1811
  %v1906 = vpop.f32.mrb[0].mxu0
  %v1907 = vadd.f32 %v1799, %v1906
  %v1908 = vpop.f32.mrb[0].mxu0
  %1909 = vmatprep.mubr.f32.mxu0 0.0
  %1910 = vmatmul.mubr.f32.gmra.mrb[0].mxu0 %v1814
  %v1911 = vpop.f32.mrb[0].mxu0
  %v1912 = vadd.f32 %v1799, %v1911
  %v1913 = vpop.f32.mrb[0].mxu0
  %1914 = vmatprep.mubr.f32.mxu0 0.0
  %1915 = vmatmul.mubr.f32.gmra.mrb[0].mxu0 %v1817
  %v1916 = vpop.f32.mrb[0].mxu0
  %v1917 = vadd.f32 %v1799, %v1916
  %v1918 = vpop.f32.mrb[0].mxu0
  %1919 = vmatprep.mubr.f32.mxu0 0.0
  %1920 = vmatmul.mubr.f32.gmra.mrb[0].mxu0 %v1820
  %v1921 = vpop.f32.mrb[0].mxu0
  %v1922 = vadd.f32 %v1799, %v1921
  %v1923 = vpop.f32.mrb[0].mxu0
  %1924 = vmatprep.mubr.f32.mxu0 0.0
  %1925 = vmatmul.mubr.f32.gmra.mrb[0].mxu0 %v1823
  %v1926 = vpop.f32.mrb[0].mxu0
  %v1927 = vadd.f32 %v1799, %v1926
  %v1928 = vpop.f32.mrb[0].mxu0
  %1929 = vdwg.mxu0
  %v1930 = vtanh.pop %v1892
  %v1931 = vtanh.pop %v1897
  %v1932 = vtanh.pop %v1902
  %v1933 = vtanh.pop %v1907
  %v1934 = vtanh.pop %v1912
  %v1935 = vtanh.pop %v1917
  %v1936 = vtanh.pop %v1922
  %v1937 = vtanh.pop %v1927
  %v1938 = vld [vmem:[%s7] sm:$0xff]
  %v1940 = vsel %vm905, %v1930, 0
  %v1943 = vsel %vm905, %v1931, 0
  %v1946 = vsel %vm905, %v1932, 0
  %v1949 = vsel %vm905, %v1933, 0
  %v1952 = vsel %vm905, %v1934, 0
  %v1955 = vsel %vm905, %v1935, 0
  %v1958 = vsel %vm905, %v1936, 0
  %v1961 = vsel %vm905, %v1937, 0
  %1963 = vmatprep.subr.mxu0 0.0
  %1964 = vmatpush1.msra.mxu0 %v1938
  %1965 = vmatprep.subr.mxu0 0.0
  %1966 = vmatpush1.msra.mxu0 0.0
  %1967 = vmatprep.subr.mxu0 0.0
  %1968 = vmatpush1.msra.mxu0 0.0
  %1969 = vmatprep.subr.mxu0 0.0
  %1970 = vmatpush1.msra.mxu0 0.0
  %1971 = vmatprep.subr.mxu0 0.0
  %1972 = vmatpush1.msra.mxu0 0.0
  %1973 = vmatprep.subr.mxu0 0.0
  %1974 = vmatpush1.msra.mxu0 0.0
  %1975 = vmatprep.subr.mxu0 0.0
  %1976 = vmatpush1.msra.mxu0 0.0
  %1977 = vmatprep.subr.mxu0 0.0
  %1978 = vmatpush1.msra.mxu0 0.0
  %1979 = vmatprep.subr.mxu0 0.0
  %1980 = vmatpush1.msra.mxu0 0.0
  %1981 = vmatprep.subr.mxu0 0.0
  %1982 = vmatpush1.msra.mxu0 0.0
  %1983 = vmatprep.subr.mxu0 0.0
  %1984 = vmatpush1.msra.mxu0 0.0
  %1985 = vmatprep.subr.mxu0 0.0
  %1986 = vmatpush1.msra.mxu0 0.0
  %1987 = vmatprep.subr.mxu0 0.0
  %1988 = vmatpush1.msra.mxu0 0.0
  %1989 = vmatprep.subr.mxu0 0.0
  %1990 = vmatpush1.msra.mxu0 0.0
  %1991 = vmatprep.subr.mxu0 0.0
  %1992 = vmatpush1.msra.mxu0 0.0
  %1993 = vmatprep.subr.mxu0 0.0
  %1994 = vmatpush1.msra.mxu0 0.0
  %1995 = vmatprep.subr.mxu0 0.0
  %1996 = vmatpush1.msra.mxu0 0.0
  %1997 = vmatprep.subr.mxu0 0.0
  %1998 = vmatpush1.msra.mxu0 0.0
  %1999 = vmatprep.subr.mxu0 0.0
  %2000 = vmatpush1.msra.mxu0 0.0
  %2001 = vmatprep.subr.mxu0 0.0
  %2002 = vmatpush1.msra.mxu0 0.0
  %2003 = vmatprep.subr.mxu0 0.0
  %2004 = vmatpush1.msra.mxu0 0.0
  %2005 = vmatprep.subr.mxu0 0.0
  %2006 = vmatpush1.msra.mxu0 0.0
  %2007 = vmatprep.subr.mxu0 0.0
  %2008 = vmatpush1.msra.mxu0 0.0
  %2009 = vmatprep.subr.mxu0 0.0
  %2010 = vmatpush1.msra.mxu0 0.0
  %2011 = vmatprep.subr.mxu0 0.0
  %2012 = vmatpush1.msra.mxu0 0.0
  %2013 = vmatprep.subr.mxu0 0.0
  %2014 = vmatpush1.msra.mxu0 0.0
  %2015 = vmatprep.subr.mxu0 0.0
  %2016 = vmatpush1.msra.mxu0 0.0
  %2017 = vmatprep.subr.mxu0 0.0
  %2018 = vmatpush1.msra.mxu0 0.0
  %2019 = vmatprep.subr.mxu0 0.0
  %2020 = vmatpush1.msra.mxu0 0.0
  %2021 = vmatprep.subr.mxu0 0.0
  %2022 = vmatpush1.msra.mxu0 0.0
  %2023 = vmatprep.subr.mxu0 0.0
  %2024 = vmatpush1.msra.mxu0 0.0
  %2025 = vmatprep.subr.mxu0 0.0
  %2026 = vmatpush1.msra.mxu0 0.0
  %2027 = vmatprep.mubr.f32.mxu0 0.0
  %2028 = vmatmul.mubr.f32.gmra.mrb[0].mxu0 %v1940
  %v2029 = vpop.f32.mrb[0].mxu0
  %v2030 = vadd.f32 0.0, %v2029
  %v2031 = vpop.f32.mrb[0].mxu0
  %2032 = vmatprep.mubr.f32.mxu0 0.0
  %2033 = vmatmul.mubr.f32.gmra.mrb[0].mxu0 %v1943
  %v2034 = vpop.f32.mrb[0].mxu0
  %v2035 = vadd.f32 0.0, %v2034
  %v2036 = vpop.f32.mrb[0].mxu0
  %2037 = vmatprep.mubr.f32.mxu0 0.0
  %2038 = vmatmul.mubr.f32.gmra.mrb[0].mxu0 %v1946
  %v2039 = vpop.f32.mrb[0].mxu0
  %v2040 = vadd.f32 0.0, %v2039
  %v2041 = vpop.f32.mrb[0].mxu0
  %2042 = vmatprep.mubr.f32.mxu0 0.0
  %2043 = vmatmul.mubr.f32.gmra.mrb[0].mxu0 %v1949
  %v2044 = vpop.f32.mrb[0].mxu0
  %v2045 = vadd.f32 0.0, %v2044
  %v2046 = vpop.f32.mrb[0].mxu0
  %2047 = vmatprep.mubr.f32.mxu0 0.0
  %2048 = vmatmul.mubr.f32.gmra.mrb[0].mxu0 %v1952
  %v2049 = vpop.f32.mrb[0].mxu0
  %v2050 = vadd.f32 0.0, %v2049
  %v2051 = vpop.f32.mrb[0].mxu0
  %2052 = vmatprep.mubr.f32.mxu0 0.0
  %2053 = vmatmul.mubr.f32.gmra.mrb[0].mxu0 %v1955
  %v2054 = vpop.f32.mrb[0].mxu0
  %v2055 = vadd.f32 0.0, %v2054
  %v2056 = vpop.f32.mrb[0].mxu0
  %2057 = vmatprep.mubr.f32.mxu0 0.0
  %2058 = vmatmul.mubr.f32.gmra.mrb[0].mxu0 %v1958
  %v2059 = vpop.f32.mrb[0].mxu0
  %v2060 = vadd.f32 0.0, %v2059
  %v2061 = vpop.f32.mrb[0].mxu0
  %2062 = vmatprep.mubr.f32.mxu0 0.0
  %2063 = vmatmul.mubr.f32.gmra.mrb[0].mxu0 %v1961
  %v2064 = vpop.f32.mrb[0].mxu0
  %v2065 = vadd.f32 0.0, %v2064
  %v2066 = vpop.f32.mrb[0].mxu0
  %2067 = vdwg.mxu0
  %v2068 = vsel %vm1035, %v2030, 0.0
  %v2069 = vsel %vm1035, %v2035, 0.0
  %v2070 = vadd.f32 %v2068, %v2069
  %v2071 = vsel %vm1035, %v2040, 0.0
  %v2072 = vadd.f32 %v2070, %v2071
  %v2073 = vsel %vm1035, %v2045, 0.0
  %v2074 = vadd.f32 %v2072, %v2073
  %v2075 = vsel %vm1035, %v2050, 0.0
  %v2076 = vadd.f32 %v2074, %v2075
  %v2077 = vsel %vm1035, %v2055, 0.0
  %v2078 = vadd.f32 %v2076, %v2077
  %v2079 = vsel %vm1035, %v2060, 0.0
  %v2080 = vadd.f32 %v2078, %v2079
  %v2081 = vsel %vm1035, %v2065, 0.0
  %v2082 = vadd.f32 %v2080, %v2081
  %2083 = vadd.xlane.f32.xlu0 %v2082
  %v2084 = vpop.xlane.xlu0 %2083
  %v2085 = vrot.slane %v2084, 4
  %v2086 = vadd.f32 %v2084, %v2085
  %v2087 = vrot.slane %v2086, 2
  %v2088 = vadd.f32 %v2086, %v2087
  %v2089 = vrot.slane %v2088, 1
  %v2090 = vadd.f32 %v2088, %v2089
  %s2091 = vtos %v2090
  %v2092 = vstv %s2091
  %v2093 = vmul.f32 %v2092, %v1061
  %v2094 = vmax.f32 %v1062, %v2093
  %v2095 = vsub.f32 %v1062, %v2094
  %v2096 = vmul.f32 %v2095, 1.442695
  %v2097 = vpow.pop %v2096
  %v2098 = vsub.f32 %v2093, %v2094
  %v2099 = vmul.f32 %v2098, 1.442695
  %v2100 = vpow.pop %v2099
  %v2101 = vadd.f32 %v2097, %v2100
  %v2102 = vrcp.pop %v2101
  %v2103 = vmul.f32 %v2097, %v2102
  %v2104 = vmul.f32 %v2103, %v747
  %v2105 = vmul.f32 %v2103, %v748
  %v2106 = vmul.f32 %v2103, %v749
  %v2107 = vmul.f32 %v2103, %v750
  %v2108 = vmul.f32 %v2103, %v751
  %v2109 = vmul.f32 %v2103, %v752
  %v2110 = vmul.f32 %v2103, %v753
  %v2111 = vmul.f32 %v2103, %v754
  %v2112 = vmul.f32 %v2100, %v2102
  %v2113 = vmul.f32 %v2112, %v1782
  %v2114 = vmul.f32 %v2112, %v1783
  %v2115 = vmul.f32 %v2112, %v1784
  %v2116 = vmul.f32 %v2112, %v1785
  %v2117 = vmul.f32 %v2112, %v1786
  %v2118 = vmul.f32 %v2112, %v1787
  %v2119 = vmul.f32 %v2112, %v1788
  %v2120 = vmul.f32 %v2112, %v1789
  %v2121 = vadd.f32 %v2104, %v2113
  %v2122 = vadd.f32 %v2105, %v2114
  %v2123 = vadd.f32 %v2106, %v2115
  %v2124 = vadd.f32 %v2107, %v2116
  %v2125 = vadd.f32 %v2108, %v2117
  %v2126 = vadd.f32 %v2109, %v2118
  %v2127 = vadd.f32 %v2110, %v2119
  %v2128 = vadd.f32 %v2111, %v2120
  %2129 = vst.msk [vmem:[%s9] sm:$0xff] %vm766, %v2121
  %2130 = vst.msk [vmem:[%s9 + $0x8] sm:$0xff] %vm766, %v2122
  %2131 = vst.msk [vmem:[%s9 + $0x10] sm:$0xff] %vm766, %v2123
  %2132 = vst.msk [vmem:[%s9 + $0x18] sm:$0xff] %vm766, %v2124
  %2133 = vst.msk [vmem:[%s9 + $0x20] sm:$0xff] %vm766, %v2125
  %2134 = vst.msk [vmem:[%s9 + $0x28] sm:$0xff] %vm766, %v2126
  %2135 = vst.msk [vmem:[%s9 + $0x30] sm:$0xff] %vm766, %v2127
  %2136 = vst.msk [vmem:[%s9 + $0x38] sm:$0xff] %vm766, %v2128
  // Predicated region
  $region34: #{tpu_custom_call.1} parent=0 // pred_check
    _
  $region35: #{tpu_custom_call.1} parent=0 // pred_check_branch
    %2138 = sbr.rel (0) target = $region37
  $region36: #{tpu_custom_call.1} parent=0 // pred_region
    _
  $region37: #{tpu_custom_call.1} parent=0 // pred_fallthru
    _
  // Predicated region
  $region38: #{tpu_custom_call.1} parent=0 // pred_check
    _
  $region39: #{tpu_custom_call.1} parent=0 // pred_check_branch
    %2140 = sbr.rel (0) target = $region41
  $region40: #{tpu_custom_call.1} parent=0 // pred_region
    _
  $region41: #{tpu_custom_call.1} parent=0 // pred_fallthru
    _
  // Predicated region
  $region42: #{tpu_custom_call.1} parent=0 // pred_check
    _
  $region43: #{tpu_custom_call.1} parent=0 // pred_check_branch
    %2142 = sbr.rel (0) target = $region45
  $region44: #{tpu_custom_call.1} parent=0 // pred_region
    _
  $region45: #{tpu_custom_call.1} parent=0 // pred_fallthru
    _
  // Predicated region
  $region46: #{tpu_custom_call.1} parent=0 // pred_check
    _
  $region47: #{tpu_custom_call.1} parent=0 // pred_check_branch
    %2144 = sbr.rel (0) target = $region49
  $region48: #{tpu_custom_call.1} parent=0 // pred_region
    _
  $region49: #{tpu_custom_call.1} parent=0 // pred_fallthru
    _

</llo_original>
